<compile_context>
chip_gen: v7x
topology: tpu7x:2x2x1
jax: 0.10.0
libtpu: 0.0.40
codegen_flags: <defaults>
</compile_context>

<pallas_src>
import functools

import jax
import jax.numpy as jnp
from jax import lax
from jax.experimental import pallas as pl
from jax.experimental.pallas import tpu as pltpu


def _round_up(a, b):
    return (a + b - 1) // b * b


def _buffered(n):
    """pipeline_mode for constant-index blocks (fall back to default if rejected)."""
    try:
        return pl.Buffered(n)
    except Exception:  # defensive: keep default double buffering
        return None


def _pick_row_tile(rows, pref):
    """Largest row tile <= pref that divides `rows` (or the full extent)."""
    if rows % pref == 0:
        return pref
    for cand in (256, 128, 64, 32, 16, 8):
        if cand <= pref and rows % cand == 0:
            return cand
    return rows  # full-extent block is always legal


def _tpu_tuning():
    """Generation-dependent (preferred row tile, vmem_limit_bytes)."""
    kind = ""
    try:
        kind = jax.devices()[0].device_kind.lower()
    except Exception:
        pass
    # 256-wide MXU on v6e / v7x; 128 on v5e and earlier.
    small_mxu = any(g in kind for g in ("v2", "v3", "v4", "v5"))
    tm_pref = 128 if small_mxu else 256
    vmem_phys = None
    try:
        vmem_phys = int(pltpu.get_tpu_info().vmem_capacity_bytes)
    except Exception:
        vmem_phys = None
    if vmem_phys is None:
        vmem_phys = 64 * 1024 * 1024 if "v7" in kind else 128 * 1024 * 1024
    # Leave DMA / compiler headroom: <= ~48 MiB on 64 MiB parts, ~96 MiB otherwise.
    vmem_limit = max(32 * 1024 * 1024,
                     min(vmem_phys - 16 * 1024 * 1024, 96 * 1024 * 1024))
    return tm_pref, int(vmem_limit)


# ------------------------------------------------------------------------------
# Kernel 1 (fused): backbone dense+ReLU -> head1 & head2 MLPs -> L2 normalize.
# grid = (view, row_tiles, k_tiles); the backbone contraction (k) is innermost.
# Weights are bf16 (MXU), accumulation f32, normalized outputs stored bf16.
# ------------------------------------------------------------------------------
def _fused_kernel(x1_ref, x2_ref, bbw_ref, bbb_ref,
                  h1w1_ref, h1b1_ref, h1w2_ref, h1b2_ref,
                  h2w1_ref, h2b1_ref, h2w2_ref, h2b2_ref,
                  z1_ref, z2_ref, acc_ref):
    v = pl.program_id(0)          # augmented view (0 -> x1, 1 -> x2)
    k = pl.program_id(2)          # backbone contraction step

    @pl.when(k == 0)
    def _():
        acc_ref[...] = jnp.zeros_like(acc_ref)

    # Select the active view's tile and cast f32 -> bf16 on the VPU (raw views
    # are read straight from HBM; no XLA concat/astype pass over x).
    x_tile = jnp.where(v == 0, x1_ref[...], x2_ref[...]).astype(jnp.bfloat16)
    acc_ref[...] += jnp.dot(x_tile, bbw_ref[...],
                            preferred_element_type=jnp.float32)

    @pl.when(k == pl.num_programs(2) - 1)
    def _():
        feat = jnp.maximum(acc_ref[...] + bbb_ref[...], 0.0).astype(jnp.bfloat16)

        # TODO(synk): if bundle dumps show this epilogue spilling at
        # ResNet-scale dim_hidden, tile the MLP over dim_hidden instead.
        def head(w1_ref, b1_ref, w2_ref, b2_ref):
            h = jnp.dot(feat, w1_ref[...],
                        preferred_element_type=jnp.float32) + b1_ref[...]
            h = jnp.maximum(h, 0.0).astype(jnp.bfloat16)
            z = jnp.dot(h, w2_ref[...],
                        preferred_element_type=jnp.float32) + b2_ref[...]
            # F.normalize(p=2, dim=1, eps=1e-12) via EUP rsqrt.
            ssq = jnp.sum(z * z, axis=-1, keepdims=True)
            return (z * lax.rsqrt(jnp.maximum(ssq, 1e-24))).astype(jnp.bfloat16)

        z1_ref[...] = head(h1w1_ref, h1b1_ref, h1w2_ref, h1b2_ref)
        z2_ref[...] = head(h2w1_ref, h2b1_ref, h2w2_ref, h2b2_ref)


def fused_backbone_heads(x1f, x2f, bb_w, params, *, tm, tk, vmem_limit):
    bpad, kpad = x1f.shape
    dim_in = bb_w.shape[1]
    dim_hidden = params["h1_w1"].shape[1]
    dim = params["h1_w2"].shape[1]
    row_tiles = bpad // tm

    def const_spec(shape):  # constant-index blocks: single-buffered
        return pl.BlockSpec(shape, lambda v, i, k: (0, 0),
                            pipeline_mode=_buffered(1))

    out_map = lambda v, i, k: (v * row_tiles + i, 0)

    z1, z2 = pl.pallas_call(
        _fused_kernel,
        out_shape=(jax.ShapeDtypeStruct((2 * bpad, dim), jnp.bfloat16),
                   jax.ShapeDtypeStruct((2 * bpad, dim), jnp.bfloat16)),
        grid=(2, row_tiles, kpad // tk),
        in_specs=[
            # Inactive view is pinned to block (0, 0): fetched once, never
            # refreshed, so x HBM traffic stays ~1x per view.
            pl.BlockSpec((tm, tk), lambda v, i, k: (i * (1 - v), k * (1 - v))),
            pl.BlockSpec((tm, tk), lambda v, i, k: (i * v, k * v)),
            pl.BlockSpec((tk, dim_in), lambda v, i, k: (k, 0)),
            const_spec((1, dim_in)),
            const_spec((dim_in, dim_hidden)), const_spec((1, dim_hidden)),
            const_spec((dim_hidden, dim)), const_spec((1, dim)),
            const_spec((dim_in, dim_hidden)), const_spec((1, dim_hidden)),
            const_spec((dim_hidden, dim)), const_spec((1, dim)),
        ],
        out_specs=(pl.BlockSpec((tm, dim), out_map),
                   pl.BlockSpec((tm, dim), out_map)),
        scratch_shapes=[pltpu.VMEM((tm, dim_in), jnp.float32)],
        compiler_params=pltpu.CompilerParams(
            dimension_semantics=("parallel", "parallel", "arbitrary"),
            vmem_limit_bytes=vmem_limit),
    )(x1f, x2f, bb_w, params["bb_b"],
      params["h1_w1"], params["h1_b1"], params["h1_w2"], params["h1_b2"],
      params["h2_w1"], params["h2_b1"], params["h2_w2"], params["h2_b2"])
    return z1, z2


# ------------------------------------------------------------------------------
# Kernel 2: logits = off-diagonal of (z @ z.T / t), emitted as (2B, 2B-1)
# directly (row r keeps prob[r, c] for c < r and prob[r, c+1] for c >= r).
# ------------------------------------------------------------------------------
def _sim_logits_kernel(z_ref, za_ref, zb_ref, o_ref, *, inv_t):
    i = pl.program_id(0)
    tm, _ = z_ref.shape
    w = za_ref.shape[0]                       # = rows - 1
    z = z_ref[...]
    # left[r, c]  = <z_r, z_c>   ; right[r, c] = <z_r, z_{c+1}>
    left = lax.dot_general(z, za_ref[...], (((1,), (1,)), ((), ())),
                           preferred_element_type=jnp.float32)
    right = lax.dot_general(z, zb_ref[...], (((1,), (1,)), ((), ())),
                            preferred_element_type=jnp.float32)
    r = i * tm + lax.broadcasted_iota(jnp.int32, (tm, w), 0)
    c = lax.broadcasted_iota(jnp.int32, (tm, w), 1)
    o_ref[...] = jnp.where(c < r, left, right) * inv_t


def sim_logits(z, t, *, tm_pref, vmem_limit):
    rows, dim = z.shape
    tm = _pick_row_tile(rows, tm_pref)
    za = z[:rows - 1]     # tiny (2B, dim) bf16 slices -> no n^2 prob in HBM and
    zb = z[1:]            # no unaligned lane slicing inside the kernel
    return pl.pallas_call(
        functools.partial(_sim_logits_kernel, inv_t=1.0 / t),
        out_shape=jax.ShapeDtypeStruct((rows, rows - 1), jnp.float32),
        grid=(rows // tm,),
        in_specs=[pl.BlockSpec((tm, dim), lambda i: (i, 0)),
                  pl.BlockSpec((rows - 1, dim), lambda i: (0, 0),
                               pipeline_mode=_buffered(1)),
                  pl.BlockSpec((rows - 1, dim), lambda i: (0, 0),
                               pipeline_mode=_buffered(1))],
        out_specs=pl.BlockSpec((tm, rows - 1), lambda i: (i, 0)),
        compiler_params=pltpu.CompilerParams(
            dimension_semantics=("parallel",),
            vmem_limit_bytes=vmem_limit),
    )(z, za, zb)


# ------------------------------------------------------------------------------
# Kernel 3: supervised-contrastive loss (sup_contra, diagnal_mask=None path):
#   loss = 0.5 * [ sup_contra(g1 @ g2.T / t, m) + sup_contra(g2 @ g1.T / t, m) ]
# One MXU matmul, one exp pass (global-max stabilized); the second term uses
# column reductions of L (mask is symmetric); mask built in-kernel from labels.
# ------------------------------------------------------------------------------
def _supcon_kernel(g1_ref, g2_ref, lab_r_ref, lab_c_ref, o_ref, *, inv_t):
    L = lax.dot_general(g1_ref[...], g2_ref[...], (((1,), (1,)), ((), ())),
                        preferred_element_type=jnp.float32) * inv_t
    # Label-equality mask on the VPU from two tiny int32 vectors (diag is 1).
    m = (lab_r_ref[...] == lab_c_ref[...]).astype(jnp.float32)

    # Single exp over L; row- and column-wise logsumexp derived from the same E.
    gmax = jnp.max(L, axis=(0, 1), keepdims=True)
    E = jnp.exp(L - gmax)
    lse_r = gmax + jnp.log(jnp.sum(E, axis=1, keepdims=True))    # (B, 1)
    lse_c = gmax + jnp.log(jnp.sum(E, axis=0, keepdims=True))    # (1, B)

    mL = m * L
    m_rsum = jnp.sum(m, axis=1, keepdims=True)
    m_csum = jnp.sum(m, axis=0, keepdims=True)
    # term 1: rows of L (= g1 @ g2.T / t); term 2: rows of L.T (= g2 @ g1.T / t)
    t1 = (jnp.sum(mL, axis=1, keepdims=True) - m_rsum * lse_r) / m_rsum
    t2 = (jnp.sum(mL, axis=0, keepdims=True) - m_csum * lse_c) / m_csum
    o_ref[0, 0] = -0.5 * (jnp.mean(t1) + jnp.mean(t2))


def supcon_forward(g1, g2, cluster_labels, t, *, vmem_limit):
    # TODO(synk): for very large B (>~2K) on v7x, tile over rows of g1/g2 with
    # accumulated column statistics; with the mask removed from VMEM the
    # single-block footprint here is ~2*B^2*4 bytes.
    b = g1.shape[0]
    lab = cluster_labels.astype(jnp.int32)
    lab_r = lab.reshape(b, 1)
    lab_c = lab.reshape(1, b)
    return pl.pallas_call(
        functools.partial(_supcon_kernel, inv_t=1.0 / t),
        out_shape=jax.ShapeDtypeStruct((1, 1), jnp.float32),
        in_specs=[pl.BlockSpec(memory_space=pltpu.MemorySpace.VMEM)] * 4,
        out_specs=pl.BlockSpec(memory_space=pltpu.MemorySpace.SMEM),
        compiler_params=pltpu.CompilerParams(vmem_limit_bytes=vmem_limit),
    )(g1, g2, lab_r, lab_c)


# ------------------------------------------------------------------------------
# Full forward (world_size == 1, rank == 0)
# ------------------------------------------------------------------------------
def clinfonce_forward(params, x1, x2, cluster_labels=None, t=0.1):
    B = x1.shape[0]

    dim_in = params["bb_w"].shape[1]
    dim_hidden = params["h1_w1"].shape[1]
    dim = params["h1_w2"].shape[1]
    assert dim_in % 128 == 0 and dim_hidden % 128 == 0 and dim % 128 == 0

    tm_pref, vmem_limit = _tpu_tuning()

    x1f = x1.reshape(B, -1).astype(jnp.float32)
    x2f = x2.reshape(B, -1).astype(jnp.float32)
    in_feat = x1f.shape[1]

    # Contraction tile (bigger tk -> fewer 'arbitrary' steps) and per-view row
    # tile (>=16 for bf16 sublane packing on small batches, 128/256 per gen).
    tk = 512 if in_feat >= 512 else _round_up(in_feat, 128)
    kpad = _round_up(in_feat, tk)
    tm = tm_pref if B >= tm_pref else _round_up(B, 16)
    bpad = _round_up(B, tm)

    bb_w = params["bb_w"]
    if kpad != in_feat:
        x1f = jnp.pad(x1f, ((0, 0), (0, kpad - in_feat)))
        x2f = jnp.pad(x2f, ((0, 0), (0, kpad - in_feat)))
        bb_w = jnp.pad(bb_w, ((0, kpad - in_feat), (0, 0)))
    if bpad != B:
        x1f = jnp.pad(x1f, ((0, bpad - B), (0, 0)))
        x2f = jnp.pad(x2f, ((0, bpad - B), (0, 0)))

    # Fused backbone + both heads + L2-normalize (single pass over x, weights
    # resident once); outputs are bf16 unit vectors. Padded rows are discarded.
    z1p, z2p = fused_backbone_heads(x1f, x2f, bb_w, params,
                                    tm=tm, tk=tk, vmem_limit=vmem_limit)

    # Valid rows: view 1 -> [0, B), view 2 -> [bpad, bpad + B).
    z1 = jnp.concatenate([z1p[:B], z1p[bpad:bpad + B]], axis=0)    # (2B, dim)

    # logits = masked_select(off-diagonal).reshape(2B, 2B-1), emitted directly.
    logits = sim_logits(z1, t, tm_pref=tm_pref, vmem_limit=vmem_limit)

    labels = jnp.concatenate(
        [jnp.arange(B - 1, 2 * B - 1), jnp.arange(0, B)]).astype(jnp.int32)

    if cluster_labels is not None:
        g1 = z2p[:B]
        g2 = z2p[bpad:bpad + B]
        loss1 = supcon_forward(g1, g2, cluster_labels, t,
                               vmem_limit=vmem_limit)[0, 0]
    else:
        loss1 = None

    return logits, labels, loss1


def init_params(key, in_feat, dim_in, dim_hidden, dim):
    ks = jax.random.split(key, 5)
    s = 0.05

    def w(k, shape):  # weights stored bf16 for the MXU; accumulation stays f32
        return (s * jax.random.normal(k, shape, jnp.float32)).astype(jnp.bfloat16)

    return {
        "bb_w": w(ks[0], (in_feat, dim_in)),
        "bb_b": jnp.zeros((1, dim_in), jnp.float32),
        "h1_w1": w(ks[1], (dim_in, dim_hidden)),
        "h1_b1": jnp.zeros((1, dim_hidden), jnp.float32),
        "h1_w2": w(ks[2], (dim_hidden, dim)),
        "h1_b2": jnp.zeros((1, dim), jnp.float32),
        "h2_w1": w(ks[3], (dim_in, dim_hidden)),
        "h2_b1": jnp.zeros((1, dim_hidden), jnp.float32),
        "h2_w2": w(ks[4], (dim_hidden, dim)),
        "h2_b2": jnp.zeros((1, dim), jnp.float32),
    }


def _reference_forward(params, x1, x2, cluster_labels, t):
    """Pure-jnp reference mirroring the kernels' bf16 casting points."""
    B = x1.shape[0]
    n = 2 * B

    def backbone(x):
        xb = x.reshape(B, -1).astype(jnp.bfloat16)
        f = jnp.dot(xb, params["bb_w"], preferred_element_type=jnp.float32)
        return jnp.maximum(f + params["bb_b"], 0.0).astype(jnp.bfloat16)

    def head(f, w1, b1, w2, b2):
        h = jnp.maximum(jnp.dot(f, w1, preferred_element_type=jnp.float32) + b1,
                        0.0).astype(jnp.bfloat16)
        z = jnp.dot(h, w2, preferred_element_type=jnp.float32) + b2
        z = z / jnp.maximum(jnp.linalg.norm(z, axis=1, keepdims=True), 1e-12)
        return z.astype(jnp.bfloat16)

    f1, f2 = backbone(x1), backbone(x2)
    z1 = jnp.concatenate(
        [head(f1, params["h1_w1"], params["h1_b1"], params["h1_w2"], params["h1_b2"]),
         head(f2, params["h1_w1"], params["h1_b1"], params["h1_w2"], params["h1_b2"])])
    prob = jnp.dot(z1, z1.T, preferred_element_type=jnp.float32) / t
    row = jnp.arange(n, dtype=jnp.int32)[:, None]
    col = jnp.arange(n - 1, dtype=jnp.int32)[None, :]
    logits = jnp.take_along_axis(prob, col + (col >= row).astype(jnp.int32), axis=1)

    g1 = head(f1, params["h2_w1"], params["h2_b1"], params["h2_w2"], params["h2_b2"])
    g2 = head(f2, params["h2_w1"], params["h2_b1"], params["h2_w2"], params["h2_b2"])
    m = (cluster_labels[:, None] == cluster_labels[None, :]).astype(jnp.float32)

    def sup_contra(L):
        log_prob = L - jnp.log(jnp.sum(jnp.exp(L), axis=1, keepdims=True))
        return jnp.mean(-jnp.sum(m * log_prob, axis=1) / jnp.sum(m, axis=1))

    La = jnp.dot(g1, g2.T, preferred_element_type=jnp.float32) / t
    Lb = jnp.dot(g2, g1.T, preferred_element_type=jnp.float32) / t
    return logits, 0.5 * (sup_contra(La) + sup_contra(Lb))


if __name__ == "__main__":
    key = jax.random.PRNGKey(0)
    B, C, H, W = 4, 4, 16, 16                  # small NCHW inputs (in_feat = 1024)
    dim_in, dim_hidden, dim = 256, 256, 128    # 128-aligned feature dims
    t = 0.1

    k1, k2, k3 = jax.random.split(key, 3)
    x1 = jax.random.normal(k1, (B, C, H, W), jnp.float32)
    x2 = jax.random.normal(k2, (B, C, H, W), jnp.float32)
    cluster_labels = jnp.array([0, 1, 0, 1], dtype=jnp.int32)

    params = init_params(k3, C * H * W, dim_in, dim_hidden, dim)

    logits, labels, loss1 = clinfonce_forward(params, x1, x2, cluster_labels, t=t)
    jax.block_until_ready((logits, labels, loss1))

    assert logits.shape == (2 * B, 2 * B - 1)
    assert labels.shape == (2 * B,)
    assert loss1.shape == ()
    assert bool(jnp.isfinite(logits).all()) and bool(jnp.isfinite(loss1))

    # Numerical sanity check against a pure-jnp reference (loose tolerance:
    # bf16 weights/activations at the same cast points, different accumulation
    # order on the MXU).
    ref_logits, ref_loss = _reference_forward(params, x1, x2, cluster_labels, t)
    assert bool(jnp.allclose(logits, ref_logits, rtol=0.05, atol=0.1))
    assert bool(jnp.allclose(loss1, ref_loss, rtol=0.05, atol=0.05))

    print("KERNEL_OK")
</pallas_src>

<mosaic_0001>
module attributes {stable_mosaic.version = 11 : i64} {
  func.func @_fused_kernel(%arg0: i32, %arg1: i32, %arg2: i32, %arg3: memref<16x512xf32, #tpu.memory_space<vmem>>, %arg4: memref<16x512xf32, #tpu.memory_space<vmem>>, %arg5: memref<512x256xbf16, #tpu.memory_space<vmem>>, %arg6: memref<1x256xf32, #tpu.memory_space<vmem>>, %arg7: memref<256x256xbf16, #tpu.memory_space<vmem>>, %arg8: memref<1x256xf32, #tpu.memory_space<vmem>>, %arg9: memref<256x128xbf16, #tpu.memory_space<vmem>>, %arg10: memref<1x128xf32, #tpu.memory_space<vmem>>, %arg11: memref<256x256xbf16, #tpu.memory_space<vmem>>, %arg12: memref<1x256xf32, #tpu.memory_space<vmem>>, %arg13: memref<256x128xbf16, #tpu.memory_space<vmem>>, %arg14: memref<1x128xf32, #tpu.memory_space<vmem>>, %arg15: memref<16x128xbf16, #tpu.memory_space<vmem>>, %arg16: memref<16x128xbf16, #tpu.memory_space<vmem>>, %arg17: memref<16x256xf32, #tpu.memory_space<vmem>>) attributes {dimension_semantics = [#tpu.dimension_semantics<parallel>, #tpu.dimension_semantics<parallel>, #tpu.dimension_semantics<arbitrary>], iteration_bounds = array<i64: 2, 1, 2>, scalar_prefetch = 0 : i64, scratch_operands = 1 : i64, tpu.core_type = #tpu.core_type<tc>, window_params = [{transform_indices = @transform_0, window_bounds = array<i64: 16, 512>}, {transform_indices = @transform_1, window_bounds = array<i64: 16, 512>}, {transform_indices = @transform_2, window_bounds = array<i64: 512, 256>}, {pipeline_mode = #tpu.pipeline_mode<synchronous>, transform_indices = @transform_3, window_bounds = array<i64: 1, 256>}, {pipeline_mode = #tpu.pipeline_mode<synchronous>, transform_indices = @transform_4, window_bounds = array<i64: 256, 256>}, {pipeline_mode = #tpu.pipeline_mode<synchronous>, transform_indices = @transform_5, window_bounds = array<i64: 1, 256>}, {pipeline_mode = #tpu.pipeline_mode<synchronous>, transform_indices = @transform_6, window_bounds = array<i64: 256, 128>}, {pipeline_mode = #tpu.pipeline_mode<synchronous>, transform_indices = @transform_7, window_bounds = array<i64: 1, 128>}, {pipeline_mode = #tpu.pipeline_mode<synchronous>, transform_indices = @transform_8, window_bounds = array<i64: 256, 256>}, {pipeline_mode = #tpu.pipeline_mode<synchronous>, transform_indices = @transform_9, window_bounds = array<i64: 1, 256>}, {pipeline_mode = #tpu.pipeline_mode<synchronous>, transform_indices = @transform_10, window_bounds = array<i64: 256, 128>}, {pipeline_mode = #tpu.pipeline_mode<synchronous>, transform_indices = @transform_11, window_bounds = array<i64: 1, 128>}, {transform_indices = @transform_12, window_bounds = array<i64: 16, 128>}, {transform_indices = @transform_13, window_bounds = array<i64: 16, 128>}]} {
    %c0_i32 = arith.constant 0 : i32
    %0 = arith.cmpi eq, %arg2, %c0_i32 : i32
    %1 = arith.extui %0 : i1 to i32
    %c0_i32_0 = arith.constant 0 : i32
    %2 = arith.cmpi ne, %1, %c0_i32_0 : i32
    scf.if %2 {
      %cst_12 = arith.constant 0.000000e+00 : f32
      %16 = vector.broadcast %cst_12 : f32 to vector<16x256xf32>
      %c0_13 = arith.constant 0 : index
      %c0_14 = arith.constant 0 : index
      %17 = vector.load %arg17[%c0_13, %c0_14] : memref<16x256xf32, #tpu.memory_space<vmem>>, vector<16x256xf32>
      tpu.vector_store %arg17[%c0_13, %c0_14], %16 {strides = array<i32>} : memref<16x256xf32, #tpu.memory_space<vmem>>, vector<16x256xf32>,
    } else {
    }
    %c0_i32_1 = arith.constant 0 : i32
    %3 = arith.cmpi eq, %arg0, %c0_i32_1 : i32
    %c0 = arith.constant 0 : index
    %c0_2 = arith.constant 0 : index
    %4 = vector.load %arg3[%c0, %c0_2] : memref<16x512xf32, #tpu.memory_space<vmem>>, vector<16x512xf32>
    %c0_3 = arith.constant 0 : index
    %c0_4 = arith.constant 0 : index
    %5 = vector.load %arg4[%c0_3, %c0_4] : memref<16x512xf32, #tpu.memory_space<vmem>>, vector<16x512xf32>
    %6 = arith.select %3, %4, %5 : vector<16x512xf32>
    %7 = arith.truncf %6 : vector<16x512xf32> to vector<16x512xbf16>
    %c0_5 = arith.constant 0 : index
    %c0_6 = arith.constant 0 : index
    %8 = vector.load %arg17[%c0_5, %c0_6] : memref<16x256xf32, #tpu.memory_space<vmem>>, vector<16x256xf32>
    %c0_7 = arith.constant 0 : index
    %c0_8 = arith.constant 0 : index
    %9 = vector.load %arg5[%c0_7, %c0_8] : memref<512x256xbf16, #tpu.memory_space<vmem>>, vector<512x256xbf16>
    %cst = arith.constant dense<0.000000e+00> : vector<16x256xf32>
    %10 = tpu.matmul %7, %9, %cst {dimension_numbers = #tpu.dot_dimension_numbers<[1], [0], [0], [1], [0, 0, 1, 1], [], []>} : vector<16x512xbf16>, vector<512x256xbf16>, vector<16x256xf32> -> vector<16x256xf32>
    %11 = arith.addf %8, %10 : vector<16x256xf32>
    %c0_9 = arith.constant 0 : index
    %c0_10 = arith.constant 0 : index
    %12 = vector.load %arg17[%c0_9, %c0_10] : memref<16x256xf32, #tpu.memory_space<vmem>>, vector<16x256xf32>
    tpu.vector_store %arg17[%c0_9, %c0_10], %11 {strides = array<i32>} : memref<16x256xf32, #tpu.memory_space<vmem>>, vector<16x256xf32>,
    %c1_i32 = arith.constant 1 : i32
    %13 = arith.cmpi eq, %arg2, %c1_i32 : i32
    %14 = arith.extui %13 : i1 to i32
    %c0_i32_11 = arith.constant 0 : i32
    %15 = arith.cmpi ne, %14, %c0_i32_11 : i32
    scf.if %15 {
      %c0_12 = arith.constant 0 : index
      %c0_13 = arith.constant 0 : index
      %16 = vector.load %arg17[%c0_12, %c0_13] : memref<16x256xf32, #tpu.memory_space<vmem>>, vector<16x256xf32>
      %c0_14 = arith.constant 0 : index
      %c0_15 = arith.constant 0 : index
      %17 = vector.load %arg6[%c0_14, %c0_15] : memref<1x256xf32, #tpu.memory_space<vmem>>, vector<1x256xf32>
      %18 = vector.broadcast %17 : vector<1x256xf32> to vector<16x256xf32>
      %19 = arith.addf %16, %18 : vector<16x256xf32>
      %cst_16 = arith.constant 0.000000e+00 : f32
      %20 = vector.broadcast %cst_16 : f32 to vector<16x256xf32>
      %21 = arith.maximumf %19, %20 : vector<16x256xf32>
      %22 = arith.truncf %21 : vector<16x256xf32> to vector<16x256xbf16>
      %c0_17 = arith.constant 0 : index
      %c0_18 = arith.constant 0 : index
      %23 = vector.load %arg7[%c0_17, %c0_18] : memref<256x256xbf16, #tpu.memory_space<vmem>>, vector<256x256xbf16>
      %cst_19 = arith.constant dense<0.000000e+00> : vector<16x256xf32>
      %24 = tpu.matmul %22, %23, %cst_19 {dimension_numbers = #tpu.dot_dimension_numbers<[1], [0], [0], [1], [0, 0, 1, 1], [], []>} : vector<16x256xbf16>, vector<256x256xbf16>, vector<16x256xf32> -> vector<16x256xf32>
      %c0_20 = arith.constant 0 : index
      %c0_21 = arith.constant 0 : index
      %25 = vector.load %arg8[%c0_20, %c0_21] : memref<1x256xf32, #tpu.memory_space<vmem>>, vector<1x256xf32>
      %26 = vector.broadcast %25 : vector<1x256xf32> to vector<16x256xf32>
      %27 = arith.addf %24, %26 : vector<16x256xf32>
      %cst_22 = arith.constant 0.000000e+00 : f32
      %28 = vector.broadcast %cst_22 : f32 to vector<16x256xf32>
      %29 = arith.maximumf %27, %28 : vector<16x256xf32>
      %30 = arith.truncf %29 : vector<16x256xf32> to vector<16x256xbf16>
      %c0_23 = arith.constant 0 : index
      %c0_24 = arith.constant 0 : index
      %31 = vector.load %arg9[%c0_23, %c0_24] : memref<256x128xbf16, #tpu.memory_space<vmem>>, vector<256x128xbf16>
      %cst_25 = arith.constant dense<0.000000e+00> : vector<16x128xf32>
      %32 = tpu.matmul %30, %31, %cst_25 {dimension_numbers = #tpu.dot_dimension_numbers<[1], [0], [0], [1], [0, 0, 1, 1], [], []>} : vector<16x256xbf16>, vector<256x128xbf16>, vector<16x128xf32> -> vector<16x128xf32>
      %c0_26 = arith.constant 0 : index
      %c0_27 = arith.constant 0 : index
      %33 = vector.load %arg10[%c0_26, %c0_27] : memref<1x128xf32, #tpu.memory_space<vmem>>, vector<1x128xf32>
      %34 = vector.broadcast %33 : vector<1x128xf32> to vector<16x128xf32>
      %35 = arith.addf %32, %34 : vector<16x128xf32>
      %36 = arith.mulf %35, %35 : vector<16x128xf32>
      %cst_28 = arith.constant dense<0.000000e+00> : vector<16xf32>
      %37 = vector.multi_reduction <add>, %36, %cst_28 [1] : vector<16x128xf32> to vector<16xf32>
      %38 = vector.shape_cast %37 : vector<16xf32> to vector<16x1xf32>
      %cst_29 = arith.constant 1.000000e-24 : f32
      %39 = vector.broadcast %cst_29 : f32 to vector<16x1xf32>
      %40 = arith.maximumf %38, %39 : vector<16x1xf32>
      %41 = math.rsqrt %40 : vector<16x1xf32>
      %42 = vector.broadcast %41 : vector<16x1xf32> to vector<16x128xf32>
      %43 = arith.mulf %35, %42 : vector<16x128xf32>
      %44 = arith.truncf %43 : vector<16x128xf32> to vector<16x128xbf16>
      %c0_30 = arith.constant 0 : index
      %c0_31 = arith.constant 0 : index
      %45 = vector.load %arg15[%c0_30, %c0_31] : memref<16x128xbf16, #tpu.memory_space<vmem>>, vector<16x128xbf16>
      tpu.vector_store %arg15[%c0_30, %c0_31], %44 {strides = array<i32>} : memref<16x128xbf16, #tpu.memory_space<vmem>>, vector<16x128xbf16>,
      %c0_32 = arith.constant 0 : index
      %c0_33 = arith.constant 0 : index
      %46 = vector.load %arg11[%c0_32, %c0_33] : memref<256x256xbf16, #tpu.memory_space<vmem>>, vector<256x256xbf16>
      %cst_34 = arith.constant dense<0.000000e+00> : vector<16x256xf32>
      %47 = tpu.matmul %22, %46, %cst_34 {dimension_numbers = #tpu.dot_dimension_numbers<[1], [0], [0], [1], [0, 0, 1, 1], [], []>} : vector<16x256xbf16>, vector<256x256xbf16>, vector<16x256xf32> -> vector<16x256xf32>
      %c0_35 = arith.constant 0 : index
      %c0_36 = arith.constant 0 : index
      %48 = vector.load %arg12[%c0_35, %c0_36] : memref<1x256xf32, #tpu.memory_space<vmem>>, vector<1x256xf32>
      %49 = vector.broadcast %48 : vector<1x256xf32> to vector<16x256xf32>
      %50 = arith.addf %47, %49 : vector<16x256xf32>
      %cst_37 = arith.constant 0.000000e+00 : f32
      %51 = vector.broadcast %cst_37 : f32 to vector<16x256xf32>
      %52 = arith.maximumf %50, %51 : vector<16x256xf32>
      %53 = arith.truncf %52 : vector<16x256xf32> to vector<16x256xbf16>
      %c0_38 = arith.constant 0 : index
      %c0_39 = arith.constant 0 : index
      %54 = vector.load %arg13[%c0_38, %c0_39] : memref<256x128xbf16, #tpu.memory_space<vmem>>, vector<256x128xbf16>
      %cst_40 = arith.constant dense<0.000000e+00> : vector<16x128xf32>
      %55 = tpu.matmul %53, %54, %cst_40 {dimension_numbers = #tpu.dot_dimension_numbers<[1], [0], [0], [1], [0, 0, 1, 1], [], []>} : vector<16x256xbf16>, vector<256x128xbf16>, vector<16x128xf32> -> vector<16x128xf32>
      %c0_41 = arith.constant 0 : index
      %c0_42 = arith.constant 0 : index
      %56 = vector.load %arg14[%c0_41, %c0_42] : memref<1x128xf32, #tpu.memory_space<vmem>>, vector<1x128xf32>
      %57 = vector.broadcast %56 : vector<1x128xf32> to vector<16x128xf32>
      %58 = arith.addf %55, %57 : vector<16x128xf32>
      %59 = arith.mulf %58, %58 : vector<16x128xf32>
      %cst_43 = arith.constant dense<0.000000e+00> : vector<16xf32>
      %60 = vector.multi_reduction <add>, %59, %cst_43 [1] : vector<16x128xf32> to vector<16xf32>
      %61 = vector.shape_cast %60 : vector<16xf32> to vector<16x1xf32>
      %cst_44 = arith.constant 1.000000e-24 : f32
      %62 = vector.broadcast %cst_44 : f32 to vector<16x1xf32>
      %63 = arith.maximumf %61, %62 : vector<16x1xf32>
      %64 = math.rsqrt %63 : vector<16x1xf32>
      %65 = vector.broadcast %64 : vector<16x1xf32> to vector<16x128xf32>
      %66 = arith.mulf %58, %65 : vector<16x128xf32>
      %67 = arith.truncf %66 : vector<16x128xf32> to vector<16x128xbf16>
      %c0_45 = arith.constant 0 : index
      %c0_46 = arith.constant 0 : index
      %68 = vector.load %arg16[%c0_45, %c0_46] : memref<16x128xbf16, #tpu.memory_space<vmem>>, vector<16x128xbf16>
      tpu.vector_store %arg16[%c0_45, %c0_46], %67 {strides = array<i32>} : memref<16x128xbf16, #tpu.memory_space<vmem>>, vector<16x128xbf16>,
    } else {
    }
    return
  }
  func.func @transform_0(%arg0: i32, %arg1: i32, %arg2: i32) -> (i32, i32) {
    %c1_i32 = arith.constant 1 : i32
    %0 = arith.subi %c1_i32, %arg0 : i32
    %1 = arith.muli %arg1, %0 : i32
    %c1_i32_0 = arith.constant 1 : i32
    %2 = arith.subi %c1_i32_0, %arg0 : i32
    %3 = arith.muli %arg2, %2 : i32
    %c0_i32 = arith.constant 0 : i32
    return %1, %3 : i32, i32
  }
  func.func @transform_1(%arg0: i32, %arg1: i32, %arg2: i32) -> (i32, i32) {
    %0 = arith.muli %arg1, %arg0 : i32
    %1 = arith.muli %arg2, %arg0 : i32
    %c0_i32 = arith.constant 0 : i32
    return %0, %1 : i32, i32
  }
  func.func @transform_2(%arg0: i32, %arg1: i32, %arg2: i32) -> (i32, i32) {
    %c0_i32 = arith.constant 0 : i32
    %c0_i32_0 = arith.constant 0 : i32
    return %arg2, %c0_i32 : i32, i32
  }
  func.func @transform_3(%arg0: i32, %arg1: i32, %arg2: i32) -> (i32, i32) {
    %c0_i32 = arith.constant 0 : i32
    %c0_i32_0 = arith.constant 0 : i32
    %c0_i32_1 = arith.constant 0 : i32
    return %c0_i32, %c0_i32_0 : i32, i32
  }
  func.func @transform_4(%arg0: i32, %arg1: i32, %arg2: i32) -> (i32, i32) {
    %c0_i32 = arith.constant 0 : i32
    %c0_i32_0 = arith.constant 0 : i32
    %c0_i32_1 = arith.constant 0 : i32
    return %c0_i32, %c0_i32_0 : i32, i32
  }
  func.func @transform_5(%arg0: i32, %arg1: i32, %arg2: i32) -> (i32, i32) {
    %c0_i32 = arith.constant 0 : i32
    %c0_i32_0 = arith.constant 0 : i32
    %c0_i32_1 = arith.constant 0 : i32
    return %c0_i32, %c0_i32_0 : i32, i32
  }
  func.func @transform_6(%arg0: i32, %arg1: i32, %arg2: i32) -> (i32, i32) {
    %c0_i32 = arith.constant 0 : i32
    %c0_i32_0 = arith.constant 0 : i32
    %c0_i32_1 = arith.constant 0 : i32
    return %c0_i32, %c0_i32_0 : i32, i32
  }
  func.func @transform_7(%arg0: i32, %arg1: i32, %arg2: i32) -> (i32, i32) {
    %c0_i32 = arith.constant 0 : i32
    %c0_i32_0 = arith.constant 0 : i32
    %c0_i32_1 = arith.constant 0 : i32
    return %c0_i32, %c0_i32_0 : i32, i32
  }
  func.func @transform_8(%arg0: i32, %arg1: i32, %arg2: i32) -> (i32, i32) {
    %c0_i32 = arith.constant 0 : i32
    %c0_i32_0 = arith.constant 0 : i32
    %c0_i32_1 = arith.constant 0 : i32
    return %c0_i32, %c0_i32_0 : i32, i32
  }
  func.func @transform_9(%arg0: i32, %arg1: i32, %arg2: i32) -> (i32, i32) {
    %c0_i32 = arith.constant 0 : i32
    %c0_i32_0 = arith.constant 0 : i32
    %c0_i32_1 = arith.constant 0 : i32
    return %c0_i32, %c0_i32_0 : i32, i32
  }
  func.func @transform_10(%arg0: i32, %arg1: i32, %arg2: i32) -> (i32, i32) {
    %c0_i32 = arith.constant 0 : i32
    %c0_i32_0 = arith.constant 0 : i32
    %c0_i32_1 = arith.constant 0 : i32
    return %c0_i32, %c0_i32_0 : i32, i32
  }
  func.func @transform_11(%arg0: i32, %arg1: i32, %arg2: i32) -> (i32, i32) {
    %c0_i32 = arith.constant 0 : i32
    %c0_i32_0 = arith.constant 0 : i32
    %c0_i32_1 = arith.constant 0 : i32
    return %c0_i32, %c0_i32_0 : i32, i32
  }
  func.func @transform_12(%arg0: i32, %arg1: i32, %arg2: i32) -> (i32, i32) {
    %c1_i32 = arith.constant 1 : i32
    %0 = arith.muli %arg0, %c1_i32 : i32
    %1 = arith.addi %0, %arg1 : i32
    %c0_i32 = arith.constant 0 : i32
    %c0_i32_0 = arith.constant 0 : i32
    return %1, %c0_i32 : i32, i32
  }
  func.func @transform_13(%arg0: i32, %arg1: i32, %arg2: i32) -> (i32, i32) {
    %c1_i32 = arith.constant 1 : i32
    %0 = arith.muli %arg0, %c1_i32 : i32
    %1 = arith.addi %0, %arg1 : i32
    %c0_i32 = arith.constant 0 : i32
    %c0_i32_0 = arith.constant 0 : i32
    return %1, %c0_i32 : i32, i32
  }
}

</mosaic_0001>

<llo_original>
// kernel: tpu_custom_call.1
$region0: #{tpu_custom_call.1}
  #allocation0 [shape = 'u32[]', space=smem, size = 0x4, offset = 0x4, fixed_abs, tag = 'smem constant byte address 0x4 - core index']
  #allocation1 [shape = 'u32[144,128]{1,0:T(1,128)}', space=vmem, size = 0x12000, scoped, tag = 'internal scratch']
  #allocation2 [shape = 'f32[16,256]{1,0:T(8,128)}', space=vmem, size = 0x4000, scoped, tag = 'scratch operand']
  %s0 = inlined_call_operand.hbm [shape: f32[16,1024], index: 0, kind: input, shape index: {}]
  %s1 = inlined_call_operand.hbm [shape: f32[16,1024], index: 1, kind: input, shape index: {}]
  %s2 = inlined_call_operand.hbm [shape: bf16[1024,256], index: 2, kind: input, shape index: {}]
  %s3 = inlined_call_operand.hbm [shape: f32[1,256], index: 3, kind: input, shape index: {}]
  %s4 = inlined_call_operand.hbm [shape: bf16[256,256], index: 4, kind: input, shape index: {}]
  %s5 = inlined_call_operand.hbm [shape: f32[1,256], index: 5, kind: input, shape index: {}]
  %s6 = inlined_call_operand.hbm [shape: bf16[256,128], index: 6, kind: input, shape index: {}]
  %s7 = inlined_call_operand.hbm [shape: f32[1,128], index: 7, kind: input, shape index: {}]
  %s8 = inlined_call_operand.hbm [shape: bf16[256,256], index: 8, kind: input, shape index: {}]
  %s9 = inlined_call_operand.hbm [shape: f32[1,256], index: 9, kind: input, shape index: {}]
  %s10 = inlined_call_operand.hbm [shape: bf16[256,128], index: 10, kind: input, shape index: {}]
  %s11 = inlined_call_operand.hbm [shape: f32[1,128], index: 11, kind: input, shape index: {}]
  %s12 = inlined_call_operand.hbm [shape: bf16[32,128], index: 12, kind: output, shape index: {0}]
  %s13 = inlined_call_operand.hbm [shape: bf16[32,128], index: 13, kind: output, shape index: {1}]
  %14 = xla_tuple %s12, %s13
  %s15 = sld [smem:[#allocation0]]
  $region145: #{tpu_custom_call.1} parent=0
    _
  %s17 = ssub.s32 1, %s15
  %s18 = scalar_select 0, %s17, %s15
  $region1: #{tpu_custom_call.1} parent=0
    #allocation3 [shape = 'u8[65536]{0}', space=vmem, size = 0x10000, scoped, tag = 'input window, operand 0']
    #allocation4 [shape = 's32[2]{0}', space=sflag, size = 0x8, scoped, tag = 'scoped memory for tpu_custom_call.1']
    #allocation5 [shape = 's32[2]{0}', space=sflag, size = 0x8, scoped, tag = 'scoped memory for tpu_custom_call.1']
    #allocation6 [shape = 'u8[65536]{0}', space=vmem, size = 0x10000, scoped, tag = 'input window, operand 1']
    #allocation7 [shape = 's32[2]{0}', space=sflag, size = 0x8, scoped, tag = 'scoped memory for tpu_custom_call.1']
    #allocation8 [shape = 'u8[524288]{0}', space=vmem, size = 0x80000, scoped, tag = 'input window, operand 2']
    #allocation9 [shape = 'u8[1024]{0}', space=vmem, size = 0x400, scoped, tag = 'input window, operand 3, single buffered']
    #allocation10 [shape = 's32[1]{0}', space=sflag, size = 0x4, scoped, tag = 'scoped memory for tpu_custom_call.1']
    #allocation11 [shape = 'u8[131072]{0}', space=vmem, size = 0x20000, scoped, tag = 'input window, operand 4, single buffered']
    #allocation12 [shape = 'u8[1024]{0}', space=vmem, size = 0x400, scoped, tag = 'input window, operand 5, single buffered']
    #allocation13 [shape = 's32[1]{0}', space=sflag, size = 0x4, scoped, tag = 'scoped memory for tpu_custom_call.1']
    #allocation14 [shape = 'u8[65536]{0}', space=vmem, size = 0x10000, scoped, tag = 'input window, operand 6, single buffered']
    #allocation15 [shape = 'u8[512]{0}', space=vmem, size = 0x400, scoped, tag = 'input window, operand 7, single buffered']
    #allocation16 [shape = 's32[1]{0}', space=sflag, size = 0x4, scoped, tag = 'scoped memory for tpu_custom_call.1']
    #allocation17 [shape = 'u8[131072]{0}', space=vmem, size = 0x20000, scoped, tag = 'input window, operand 8, single buffered']
    #allocation18 [shape = 'u8[1024]{0}', space=vmem, size = 0x400, scoped, tag = 'input window, operand 9, single buffered']
    #allocation19 [shape = 's32[1]{0}', space=sflag, size = 0x4, scoped, tag = 'scoped memory for tpu_custom_call.1']
    #allocation20 [shape = 'u8[65536]{0}', space=vmem, size = 0x10000, scoped, tag = 'input window, operand 10, single buffered']
    #allocation21 [shape = 'u8[512]{0}', space=vmem, size = 0x400, scoped, tag = 'input window, operand 11, single buffered']
    #allocation22 [shape = 's32[1]{0}', space=sflag, size = 0x4, scoped, tag = 'scoped memory for tpu_custom_call.1']
    #allocation23 [shape = 'u8[8192]{0}', space=vmem, size = 0x2000, scoped, tag = 'output window, operand 0']
    #allocation24 [shape = 'u8[8192]{0}', space=vmem, size = 0x2000, scoped, tag = 'output window, operand 1']
    #allocation25 [shape = 's32[2]{0}', space=sflag, size = 0x8, scoped, tag = 'scoped memory for tpu_custom_call.1']
    %19 = vsyncpa [#allocation4], 0
    %s20 = scalar_lea.sflag [#allocation4], 1
    %21 = vsyncpa %s20, 0
    %22 = vsyncpa [#allocation7], 0
    %s23 = scalar_lea.sflag [#allocation7], 1
    %24 = vsyncpa %s23, 0
    %25 = vsyncpa [#allocation10], 0
    %26 = vsyncpa [#allocation13], 0
    %27 = vsyncpa [#allocation16], 0
    %28 = vsyncpa [#allocation19], 0
    %29 = vsyncpa [#allocation22], 0
    %30 = vsyncpa [#allocation5], 0
    %s31 = scalar_lea.sflag [#allocation5], 1
    %32 = vsyncpa %s31, 0
    %33 = vsyncpa [#allocation25], 0
    %s34 = scalar_lea.sflag [#allocation25], 1
    %35 = vsyncpa %s34, 0
    loop: start=0, step=1, limit=6
    $region2: #{tpu_custom_call.1} parent=1 // loop_pre_header
      _
    $region3: #{tpu_custom_call.1} parent=1 // loop_header
      %s37 = sphi 0, %s41
      %p38 = scmp.ge.s32.totalorder %s37, 6
      %s44 = sphi 0, %s63
      %s45 = sphi 0, %s59
      %s46 = sphi 0, %s55
      %s47 = sphi 0, %s44
      %s48 = sphi 0, %s45
      %s49 = sphi 0, %s46
      %s50 = sphi 0, %s47
      %s51 = sphi 0, %s48
      %s52 = sphi 0, %s49
      %s74 = sphi 0, %s76
      %s77 = sphi 0, %s74
      %s78 = sphi 0, %s77
      %s94 = sphi 0, %s78
      %s106 = sphi 0, %s108
      %s109 = sphi 0, %s106
      %s110 = sphi 0, %s109
      %s126 = sphi 0, %s110
      %s132 = sphi 0, %s134
      %s135 = sphi 0, %s132
      %s136 = sphi 0, %s135
      %s152 = sphi 0, %s136
      %s156 = sphi 0, %s156
      %s158 = sphi 0, %s156
      %s159 = sphi 0, %s158
      %s173 = sphi 0, %s159
      %s177 = sphi 0, %s177
      %s179 = sphi 0, %s177
      %s180 = sphi 0, %s179
      %s194 = sphi 0, %s180
      %s198 = sphi 0, %s198
      %s200 = sphi 0, %s198
      %s201 = sphi 0, %s200
      %s215 = sphi 0, %s201
      %s219 = sphi 0, %s219
      %s221 = sphi 0, %s219
      %s222 = sphi 0, %s221
      %s236 = sphi 0, %s222
      %s240 = sphi 0, %s240
      %s242 = sphi 0, %s240
      %s243 = sphi 0, %s242
      %s257 = sphi 0, %s243
      %s261 = sphi 0, %s261
      %s263 = sphi 0, %s261
      %s264 = sphi 0, %s263
      %s278 = sphi 0, %s264
      %s282 = sphi 0, %s282
      %s284 = sphi 0, %s282
      %s285 = sphi 0, %s284
      %s299 = sphi 0, %s285
      %s303 = sphi 0, %s303
      %s305 = sphi 0, %s303
      %s306 = sphi 0, %s305
      %s320 = sphi 0, %s306
      %s324 = sphi 0, %s324
      %s326 = sphi 0, %s324
      %s327 = sphi 0, %s326
      %s341 = sphi 0, %s327
      %s349 = sphi 0, %s351
      %s352 = sphi 0, %s349
      %s353 = sphi 0, %s352
      %s369 = sphi 0, %s353
      %s377 = sphi 0, %s379
      %s380 = sphi 0, %s377
      %s381 = sphi 0, %s380
      %s397 = sphi 0, %s381
    $region4: #{tpu_custom_call.1} parent=1 // loop_header_branch
      %40 = sbr.rel (%p38) target = $region8
    $region5: #{tpu_custom_call.1} parent=1 // loop_body
      %s42 = ssub.s32 %s37, 1
      %s43 = ssub.s32 %s37, 2
      %s53 = sadd.s32 1, %s46
      %p54 = scmp.ge.s32.totalorder %s53, 2
      %s55 = scalar_select %p54, 0, %s53
      %s56 = sadd.s32 1, %s45
      %s57 = scalar_select %p54, %s56, %s45
      %p58 = scmp.ge.s32.totalorder %s57, 1
      %s59 = scalar_select %p58, 0, %s57
      %s60 = sadd.s32 1, %s44
      %s61 = scalar_select %p58, %s60, %s44
      %p62 = scmp.ge.s32.totalorder %s61, 2
      %s63 = scalar_select %p62, 0, %s61
      %s64 = ssub.s32 1, %s44
      %s65 = smul.u32 %s45, %s64
      %s66 = smul.u32 %s46, %s64
      %s67 = ssub.s32 1, %s63
      %s68 = smul.u32 %s59, %s67
      %s69 = smul.u32 %s55, %s67
      %s70 = ssub.s32 %s65, %s68
      %s71 = ssub.s32 %s66, %s69
      %s72 = sor.u32 %s70, %s71
      %p73 = scmp.eq.s32.totalorder %s72, 0
      %s75 = sadd.s32 %s74, 1
      %s76 = scalar_select %p73, %s74, %s75
      %p79 = pneg %p73
      %p80 = scmp.eq.s32.totalorder %s37, 3
      %p81 = por %p79, %p80
      %p82 = scmp.ne.s32.totalorder %s74, %s77
      %p83 = scmp.eq.s32.totalorder %s37, 0
      %p84 = por %p82, %p83
      %p85 = scmp.ne.s32.totalorder %s74, %s77
      %p86 = scmp.eq.s32.totalorder %s42, 3
      %p87 = por %p85, %p86
      %p88 = scmp.ne.s32.totalorder %s77, %s78
      %p89 = scmp.eq.s32.totalorder %s42, 0
      %p90 = por %p88, %p89
      %p91 = scmp.ne.s32.totalorder %s77, %s78
      %p92 = scmp.eq.s32.totalorder %s43, 3
      %p93 = por %p91, %p92
      %p95 = scmp.ne.s32.totalorder %s78, %s94
      %p96 = scmp.eq.s32.totalorder %s43, 0
      %p97 = por %p95, %p96
      %s98 = smul.u32 %s45, %s44
      %s99 = smul.u32 %s46, %s44
      %s100 = smul.u32 %s59, %s63
      %s101 = smul.u32 %s55, %s63
      %s102 = ssub.s32 %s98, %s100
      %s103 = ssub.s32 %s99, %s101
      %s104 = sor.u32 %s102, %s103
      %p105 = scmp.eq.s32.totalorder %s104, 0
      %s107 = sadd.s32 %s106, 1
      %s108 = scalar_select %p105, %s106, %s107
      %p111 = pneg %p105
      %p112 = scmp.eq.s32.totalorder %s37, 3
      %p113 = por %p111, %p112
      %p114 = scmp.ne.s32.totalorder %s106, %s109
      %p115 = scmp.eq.s32.totalorder %s37, 0
      %p116 = por %p114, %p115
      %p117 = scmp.ne.s32.totalorder %s106, %s109
      %p118 = scmp.eq.s32.totalorder %s42, 3
      %p119 = por %p117, %p118
      %p120 = scmp.ne.s32.totalorder %s109, %s110
      %p121 = scmp.eq.s32.totalorder %s42, 0
      %p122 = por %p120, %p121
      %p123 = scmp.ne.s32.totalorder %s109, %s110
      %p124 = scmp.eq.s32.totalorder %s43, 3
      %p125 = por %p123, %p124
      %p127 = scmp.ne.s32.totalorder %s110, %s126
      %p128 = scmp.eq.s32.totalorder %s43, 0
      %p129 = por %p127, %p128
      %s130 = ssub.s32 %s46, %s55
      %p131 = scmp.eq.s32.totalorder %s130, 0
      %s133 = sadd.s32 %s132, 1
      %s134 = scalar_select %p131, %s132, %s133
      %p137 = pneg %p131
      %p138 = scmp.eq.s32.totalorder %s37, 3
      %p139 = por %p137, %p138
      %p140 = scmp.ne.s32.totalorder %s132, %s135
      %p141 = scmp.eq.s32.totalorder %s37, 0
      %p142 = por %p140, %p141
      %p143 = scmp.ne.s32.totalorder %s132, %s135
      %p144 = scmp.eq.s32.totalorder %s42, 3
      %p145 = por %p143, %p144
      %p146 = scmp.ne.s32.totalorder %s135, %s136
      %p147 = scmp.eq.s32.totalorder %s42, 0
      %p148 = por %p146, %p147
      %p149 = scmp.ne.s32.totalorder %s135, %s136
      %p150 = scmp.eq.s32.totalorder %s43, 3
      %p151 = por %p149, %p150
      %p153 = scmp.ne.s32.totalorder %s136, %s152
      %p154 = scmp.eq.s32.totalorder %s43, 0
      %p155 = por %p153, %p154
      %s157 = sadd.s32 %s156, 1
      %p160 = scmp.eq.s32.totalorder %s37, 3
      %p161 = scmp.ne.s32.totalorder %s156, %s158
      %p162 = scmp.eq.s32.totalorder %s37, 0
      %p163 = por %p161, %p162
      %p164 = scmp.ne.s32.totalorder %s156, %s158
      %p165 = scmp.eq.s32.totalorder %s42, 3
      %p166 = por %p164, %p165
      %p167 = scmp.ne.s32.totalorder %s158, %s159
      %p168 = scmp.eq.s32.totalorder %s42, 0
      %p169 = por %p167, %p168
      %p170 = scmp.ne.s32.totalorder %s158, %s159
      %p171 = scmp.eq.s32.totalorder %s43, 3
      %p172 = por %p170, %p171
      %p174 = scmp.ne.s32.totalorder %s159, %s173
      %p175 = scmp.eq.s32.totalorder %s43, 0
      %p176 = por %p174, %p175
      %s178 = sadd.s32 %s177, 1
      %p181 = scmp.eq.s32.totalorder %s37, 3
      %p182 = scmp.ne.s32.totalorder %s177, %s179
      %p183 = scmp.eq.s32.totalorder %s37, 0
      %p184 = por %p182, %p183
      %p185 = scmp.ne.s32.totalorder %s177, %s179
      %p186 = scmp.eq.s32.totalorder %s42, 3
      %p187 = por %p185, %p186
      %p188 = scmp.ne.s32.totalorder %s179, %s180
      %p189 = scmp.eq.s32.totalorder %s42, 0
      %p190 = por %p188, %p189
      %p191 = scmp.ne.s32.totalorder %s179, %s180
      %p192 = scmp.eq.s32.totalorder %s43, 3
      %p193 = por %p191, %p192
      %p195 = scmp.ne.s32.totalorder %s180, %s194
      %p196 = scmp.eq.s32.totalorder %s43, 0
      %p197 = por %p195, %p196
      %s199 = sadd.s32 %s198, 1
      %p202 = scmp.eq.s32.totalorder %s37, 3
      %p203 = scmp.ne.s32.totalorder %s198, %s200
      %p204 = scmp.eq.s32.totalorder %s37, 0
      %p205 = por %p203, %p204
      %p206 = scmp.ne.s32.totalorder %s198, %s200
      %p207 = scmp.eq.s32.totalorder %s42, 3
      %p208 = por %p206, %p207
      %p209 = scmp.ne.s32.totalorder %s200, %s201
      %p210 = scmp.eq.s32.totalorder %s42, 0
      %p211 = por %p209, %p210
      %p212 = scmp.ne.s32.totalorder %s200, %s201
      %p213 = scmp.eq.s32.totalorder %s43, 3
      %p214 = por %p212, %p213
      %p216 = scmp.ne.s32.totalorder %s201, %s215
      %p217 = scmp.eq.s32.totalorder %s43, 0
      %p218 = por %p216, %p217
      %s220 = sadd.s32 %s219, 1
      %p223 = scmp.eq.s32.totalorder %s37, 3
      %p224 = scmp.ne.s32.totalorder %s219, %s221
      %p225 = scmp.eq.s32.totalorder %s37, 0
      %p226 = por %p224, %p225
      %p227 = scmp.ne.s32.totalorder %s219, %s221
      %p228 = scmp.eq.s32.totalorder %s42, 3
      %p229 = por %p227, %p228
      %p230 = scmp.ne.s32.totalorder %s221, %s222
      %p231 = scmp.eq.s32.totalorder %s42, 0
      %p232 = por %p230, %p231
      %p233 = scmp.ne.s32.totalorder %s221, %s222
      %p234 = scmp.eq.s32.totalorder %s43, 3
      %p235 = por %p233, %p234
      %p237 = scmp.ne.s32.totalorder %s222, %s236
      %p238 = scmp.eq.s32.totalorder %s43, 0
      %p239 = por %p237, %p238
      %s241 = sadd.s32 %s240, 1
      %p244 = scmp.eq.s32.totalorder %s37, 3
      %p245 = scmp.ne.s32.totalorder %s240, %s242
      %p246 = scmp.eq.s32.totalorder %s37, 0
      %p247 = por %p245, %p246
      %p248 = scmp.ne.s32.totalorder %s240, %s242
      %p249 = scmp.eq.s32.totalorder %s42, 3
      %p250 = por %p248, %p249
      %p251 = scmp.ne.s32.totalorder %s242, %s243
      %p252 = scmp.eq.s32.totalorder %s42, 0
      %p253 = por %p251, %p252
      %p254 = scmp.ne.s32.totalorder %s242, %s243
      %p255 = scmp.eq.s32.totalorder %s43, 3
      %p256 = por %p254, %p255
      %p258 = scmp.ne.s32.totalorder %s243, %s257
      %p259 = scmp.eq.s32.totalorder %s43, 0
      %p260 = por %p258, %p259
      %s262 = sadd.s32 %s261, 1
      %p265 = scmp.eq.s32.totalorder %s37, 3
      %p266 = scmp.ne.s32.totalorder %s261, %s263
      %p267 = scmp.eq.s32.totalorder %s37, 0
      %p268 = por %p266, %p267
      %p269 = scmp.ne.s32.totalorder %s261, %s263
      %p270 = scmp.eq.s32.totalorder %s42, 3
      %p271 = por %p269, %p270
      %p272 = scmp.ne.s32.totalorder %s263, %s264
      %p273 = scmp.eq.s32.totalorder %s42, 0
      %p274 = por %p272, %p273
      %p275 = scmp.ne.s32.totalorder %s263, %s264
      %p276 = scmp.eq.s32.totalorder %s43, 3
      %p277 = por %p275, %p276
      %p279 = scmp.ne.s32.totalorder %s264, %s278
      %p280 = scmp.eq.s32.totalorder %s43, 0
      %p281 = por %p279, %p280
      %s283 = sadd.s32 %s282, 1
      %p286 = scmp.eq.s32.totalorder %s37, 3
      %p287 = scmp.ne.s32.totalorder %s282, %s284
      %p288 = scmp.eq.s32.totalorder %s37, 0
      %p289 = por %p287, %p288
      %p290 = scmp.ne.s32.totalorder %s282, %s284
      %p291 = scmp.eq.s32.totalorder %s42, 3
      %p292 = por %p290, %p291
      %p293 = scmp.ne.s32.totalorder %s284, %s285
      %p294 = scmp.eq.s32.totalorder %s42, 0
      %p295 = por %p293, %p294
      %p296 = scmp.ne.s32.totalorder %s284, %s285
      %p297 = scmp.eq.s32.totalorder %s43, 3
      %p298 = por %p296, %p297
      %p300 = scmp.ne.s32.totalorder %s285, %s299
      %p301 = scmp.eq.s32.totalorder %s43, 0
      %p302 = por %p300, %p301
      %s304 = sadd.s32 %s303, 1
      %p307 = scmp.eq.s32.totalorder %s37, 3
      %p308 = scmp.ne.s32.totalorder %s303, %s305
      %p309 = scmp.eq.s32.totalorder %s37, 0
      %p310 = por %p308, %p309
      %p311 = scmp.ne.s32.totalorder %s303, %s305
      %p312 = scmp.eq.s32.totalorder %s42, 3
      %p313 = por %p311, %p312
      %p314 = scmp.ne.s32.totalorder %s305, %s306
      %p315 = scmp.eq.s32.totalorder %s42, 0
      %p316 = por %p314, %p315
      %p317 = scmp.ne.s32.totalorder %s305, %s306
      %p318 = scmp.eq.s32.totalorder %s43, 3
      %p319 = por %p317, %p318
      %p321 = scmp.ne.s32.totalorder %s306, %s320
      %p322 = scmp.eq.s32.totalorder %s43, 0
      %p323 = por %p321, %p322
      %s325 = sadd.s32 %s324, 1
      %p328 = scmp.eq.s32.totalorder %s37, 3
      %p329 = scmp.ne.s32.totalorder %s324, %s326
      %p330 = scmp.eq.s32.totalorder %s37, 0
      %p331 = por %p329, %p330
      %p332 = scmp.ne.s32.totalorder %s324, %s326
      %p333 = scmp.eq.s32.totalorder %s42, 3
      %p334 = por %p332, %p333
      %p335 = scmp.ne.s32.totalorder %s326, %s327
      %p336 = scmp.eq.s32.totalorder %s42, 0
      %p337 = por %p335, %p336
      %p338 = scmp.ne.s32.totalorder %s326, %s327
      %p339 = scmp.eq.s32.totalorder %s43, 3
      %p340 = por %p338, %p339
      %p342 = scmp.ne.s32.totalorder %s327, %s341
      %p343 = scmp.eq.s32.totalorder %s43, 0
      %p344 = por %p342, %p343
      %s345 = sadd.s32 %s44, %s45
      %s346 = sadd.s32 %s63, %s59
      %s347 = ssub.s32 %s345, %s346
      %p348 = scmp.eq.s32.totalorder %s347, 0
      %s350 = sadd.s32 %s349, 1
      %s351 = scalar_select %p348, %s349, %s350
      %p354 = pneg %p348
      %p355 = scmp.eq.s32.totalorder %s37, 3
      %p356 = por %p354, %p355
      %p357 = scmp.ne.s32.totalorder %s349, %s352
      %p358 = scmp.eq.s32.totalorder %s37, 0
      %p359 = por %p357, %p358
      %p360 = scmp.ne.s32.totalorder %s349, %s352
      %p361 = scmp.eq.s32.totalorder %s42, 3
      %p362 = por %p360, %p361
      %p363 = scmp.ne.s32.totalorder %s352, %s353
      %p364 = scmp.eq.s32.totalorder %s42, 0
      %p365 = por %p363, %p364
      %p366 = scmp.ne.s32.totalorder %s352, %s353
      %p367 = scmp.eq.s32.totalorder %s43, 3
      %p368 = por %p366, %p367
      %p370 = scmp.ne.s32.totalorder %s353, %s369
      %p371 = scmp.eq.s32.totalorder %s43, 0
      %p372 = por %p370, %p371
      %s373 = sadd.s32 %s44, %s45
      %s374 = sadd.s32 %s63, %s59
      %s375 = ssub.s32 %s373, %s374
      %p376 = scmp.eq.s32.totalorder %s375, 0
      %s378 = sadd.s32 %s377, 1
      %s379 = scalar_select %p376, %s377, %s378
      %p382 = pneg %p376
      %p383 = scmp.eq.s32.totalorder %s37, 3
      %p384 = por %p382, %p383
      %p385 = scmp.ne.s32.totalorder %s377, %s380
      %p386 = scmp.eq.s32.totalorder %s37, 0
      %p387 = por %p385, %p386
      %p388 = scmp.ne.s32.totalorder %s377, %s380
      %p389 = scmp.eq.s32.totalorder %s42, 3
      %p390 = por %p388, %p389
      %p391 = scmp.ne.s32.totalorder %s380, %s381
      %p392 = scmp.eq.s32.totalorder %s42, 0
      %p393 = por %p391, %p392
      %p394 = scmp.ne.s32.totalorder %s380, %s381
      %p395 = scmp.eq.s32.totalorder %s43, 3
      %p396 = por %p394, %p395
      %p398 = scmp.ne.s32.totalorder %s381, %s397
      %p399 = scmp.eq.s32.totalorder %s43, 0
      %p400 = por %p398, %p399
      %p401 = scmp.le.s32.totalorder 1, %s37
      %p402 = scmp.lt.s32.totalorder %s37, 5
      %p403 = pnand %p401, %p402
      %p404 = pneg %p403
      // Predicated region
      $region9: #{tpu_custom_call.1} parent=5 // pred_check
        _
      $region10: #{tpu_custom_call.1} parent=5 // pred_check_branch
        %406 = sbr.rel (%p403) target = $region12
      $region11: #{tpu_custom_call.1} parent=5 // pred_region
        %s407 = ssub.s32 %s37, 1
        // Predicated region
        $region13: #{tpu_custom_call.1} parent=11 // pred_check
          %p408 = pneg %p169
        $region14: #{tpu_custom_call.1} parent=11 // pred_check_branch
          %410 = sbr.rel (%p408) target = $region16
        $region15: #{tpu_custom_call.1} parent=11 // pred_region
          %s412 = ssub.s32 32, 32
          %413 = vsyncadd [#allocation10], %s412
          %s415 = sshll.u32 [#allocation9], 4
          %s416 = int_to_ptr.vmem [resolvable:$true] %s415
          %418 = dma.hbm_to_vmem [thread:$0]  %s3, 32, %s416, [#allocation10]
        $region16: #{tpu_custom_call.1} parent=11 // pred_fallthru
          _
        // Predicated region
        $region17: #{tpu_custom_call.1} parent=11 // pred_check
          %p419 = pneg %p190
        $region18: #{tpu_custom_call.1} parent=11 // pred_check_branch
          %421 = sbr.rel (%p419) target = $region20
        $region19: #{tpu_custom_call.1} parent=11 // pred_region
          %s423 = ssub.s32 4096, 4096
          %424 = vsyncadd [#allocation10], %s423
          %s425 = sshll.u32 [#allocation11], 4
          %s426 = int_to_ptr.vmem [resolvable:$true] %s425
          %431 = dma.hbm_to_vmem [thread:$0]  %s4, 4096, %s426, [#allocation10], 128, 128, 8
        $region20: #{tpu_custom_call.1} parent=11 // pred_fallthru
          _
        // Predicated region
        $region21: #{tpu_custom_call.1} parent=11 // pred_check
          %p432 = pneg %p211
        $region22: #{tpu_custom_call.1} parent=11 // pred_check_branch
          %434 = sbr.rel (%p432) target = $region24
        $region23: #{tpu_custom_call.1} parent=11 // pred_region
          %s436 = ssub.s32 32, 32
          %437 = vsyncadd [#allocation13], %s436
          %s439 = sshll.u32 [#allocation12], 4
          %s440 = int_to_ptr.vmem [resolvable:$true] %s439
          %442 = dma.hbm_to_vmem [thread:$0]  %s5, 32, %s440, [#allocation13]
        $region24: #{tpu_custom_call.1} parent=11 // pred_fallthru
          _
        // Predicated region
        $region25: #{tpu_custom_call.1} parent=11 // pred_check
          %p443 = pneg %p232
        $region26: #{tpu_custom_call.1} parent=11 // pred_check_branch
          %445 = sbr.rel (%p443) target = $region28
        $region27: #{tpu_custom_call.1} parent=11 // pred_region
          %s447 = ssub.s32 2048, 2048
          %448 = vsyncadd [#allocation13], %s447
          %s449 = sshll.u32 [#allocation14], 4
          %s450 = int_to_ptr.vmem [resolvable:$true] %s449
          %455 = dma.hbm_to_vmem [thread:$0]  %s6, 2048, %s450, [#allocation13], 64, 64, 4
        $region28: #{tpu_custom_call.1} parent=11 // pred_fallthru
          _
        // Predicated region
        $region29: #{tpu_custom_call.1} parent=11 // pred_check
          %p456 = pneg %p253
        $region30: #{tpu_custom_call.1} parent=11 // pred_check_branch
          %458 = sbr.rel (%p456) target = $region32
        $region31: #{tpu_custom_call.1} parent=11 // pred_region
          %s460 = ssub.s32 16, 16
          %461 = vsyncadd [#allocation16], %s460
          %s463 = sshll.u32 [#allocation15], 4
          %s464 = int_to_ptr.vmem [resolvable:$true] %s463
          %466 = dma.hbm_to_vmem [thread:$0]  %s7, 16, %s464, [#allocation16]
        $region32: #{tpu_custom_call.1} parent=11 // pred_fallthru
          _
        // Predicated region
        $region33: #{tpu_custom_call.1} parent=11 // pred_check
          %p467 = pneg %p274
        $region34: #{tpu_custom_call.1} parent=11 // pred_check_branch
          %469 = sbr.rel (%p467) target = $region36
        $region35: #{tpu_custom_call.1} parent=11 // pred_region
          %s471 = ssub.s32 4096, 4096
          %472 = vsyncadd [#allocation16], %s471
          %s473 = sshll.u32 [#allocation17], 4
          %s474 = int_to_ptr.vmem [resolvable:$true] %s473
          %479 = dma.hbm_to_vmem [thread:$0]  %s8, 4096, %s474, [#allocation16], 128, 128, 8
        $region36: #{tpu_custom_call.1} parent=11 // pred_fallthru
          _
        // Predicated region
        $region37: #{tpu_custom_call.1} parent=11 // pred_check
          %p480 = pneg %p295
        $region38: #{tpu_custom_call.1} parent=11 // pred_check_branch
          %482 = sbr.rel (%p480) target = $region40
        $region39: #{tpu_custom_call.1} parent=11 // pred_region
          %s484 = ssub.s32 32, 32
          %485 = vsyncadd [#allocation19], %s484
          %s487 = sshll.u32 [#allocation18], 4
          %s488 = int_to_ptr.vmem [resolvable:$true] %s487
          %490 = dma.hbm_to_vmem [thread:$0]  %s9, 32, %s488, [#allocation19]
        $region40: #{tpu_custom_call.1} parent=11 // pred_fallthru
          _
        // Predicated region
        $region41: #{tpu_custom_call.1} parent=11 // pred_check
          %p491 = pneg %p316
        $region42: #{tpu_custom_call.1} parent=11 // pred_check_branch
          %493 = sbr.rel (%p491) target = $region44
        $region43: #{tpu_custom_call.1} parent=11 // pred_region
          %s495 = ssub.s32 2048, 2048
          %496 = vsyncadd [#allocation19], %s495
          %s497 = sshll.u32 [#allocation20], 4
          %s498 = int_to_ptr.vmem [resolvable:$true] %s497
          %503 = dma.hbm_to_vmem [thread:$0]  %s10, 2048, %s498, [#allocation19], 64, 64, 4
        $region44: #{tpu_custom_call.1} parent=11 // pred_fallthru
          _
        // Predicated region
        $region45: #{tpu_custom_call.1} parent=11 // pred_check
          %p504 = pneg %p337
        $region46: #{tpu_custom_call.1} parent=11 // pred_check_branch
          %506 = sbr.rel (%p504) target = $region48
        $region47: #{tpu_custom_call.1} parent=11 // pred_region
          %s508 = ssub.s32 16, 16
          %509 = vsyncadd [#allocation22], %s508
          %s511 = sshll.u32 [#allocation21], 4
          %s512 = int_to_ptr.vmem [resolvable:$true] %s511
          %514 = dma.hbm_to_vmem [thread:$0]  %s11, 16, %s512, [#allocation22]
        $region48: #{tpu_custom_call.1} parent=11 // pred_fallthru
          _
      $region12: #{tpu_custom_call.1} parent=5 // pred_fallthru
        _
      %p515 = scmp.lt.s32.totalorder %s37, 4
      // Predicated region
      $region49: #{tpu_custom_call.1} parent=5 // pred_check
        %p516 = pneg %p515
      $region50: #{tpu_custom_call.1} parent=5 // pred_check_branch
        %518 = sbr.rel (%p516) target = $region52
      $region51: #{tpu_custom_call.1} parent=5 // pred_region
        // Predicated region
        $region53: #{tpu_custom_call.1} parent=51 // pred_check
          %p519 = pneg %p84
        $region54: #{tpu_custom_call.1} parent=51 // pred_check_branch
          %521 = sbr.rel (%p519) target = $region56
        $region55: #{tpu_custom_call.1} parent=51 // pred_region
          %s522 = sand.u32 %s74, 1
          %s523 = scalar_lea.sflag [#allocation4], %s522
          %s524 = sand.u32 %s74, 1
          %s525 = smul.addr %s524, 64
          %s526 = scalar_lea.vmem [#allocation3], %s525
          %s527 = ssub.s32 1, %s44
          %s528 = smul.u32 %s45, %s527
          %s529 = smul.u32 %s46, %s527
          %s530 = smul.u32 2, %s528
          %s531 = smul.u32 4, %s529
          %s533 = ssub.s32 1024, 1024
          %534 = vsyncadd %s523, %s533
          %s535 = smul.addr %s530, 8
          %s536 = sadd.s32 %s531, %s535
          %s537 = smul.addr %s536, 128
          %s538 = scalar_lea.hbm %s0, %s537
          %s539 = sshll.u32 %s526, 4
          %s540 = int_to_ptr.vmem [resolvable:$true] %s539
          %545 = dma.hbm_to_vmem [thread:$0]  %s538, 1024, %s540, %s523, 1024, 512, 32
        $region56: #{tpu_custom_call.1} parent=51 // pred_fallthru
          _
        // Predicated region
        $region57: #{tpu_custom_call.1} parent=51 // pred_check
          %p546 = pneg %p116
        $region58: #{tpu_custom_call.1} parent=51 // pred_check_branch
          %548 = sbr.rel (%p546) target = $region60
        $region59: #{tpu_custom_call.1} parent=51 // pred_region
          %s549 = sand.u32 %s37, 1
          %s550 = scalar_lea.sflag [#allocation7], %s549
          %s551 = sand.u32 %s106, 1
          %s552 = smul.addr %s551, 64
          %s553 = scalar_lea.vmem [#allocation6], %s552
          %s554 = smul.u32 %s45, %s44
          %s555 = smul.u32 %s46, %s44
          %s556 = smul.u32 2, %s554
          %s557 = smul.u32 4, %s555
          %s559 = ssub.s32 1024, 1024
          %560 = vsyncadd %s550, %s559
          %s561 = smul.addr %s556, 8
          %s562 = sadd.s32 %s557, %s561
          %s563 = smul.addr %s562, 128
          %s564 = scalar_lea.hbm %s1, %s563
          %s565 = sshll.u32 %s553, 4
          %s566 = int_to_ptr.vmem [resolvable:$true] %s565
          %571 = dma.hbm_to_vmem [thread:$0]  %s564, 1024, %s566, %s550, 1024, 512, 32
        $region60: #{tpu_custom_call.1} parent=51 // pred_fallthru
          _
        // Predicated region
        $region61: #{tpu_custom_call.1} parent=51 // pred_check
          %p572 = pneg %p142
        $region62: #{tpu_custom_call.1} parent=51 // pred_check_branch
          %574 = sbr.rel (%p572) target = $region64
        $region63: #{tpu_custom_call.1} parent=51 // pred_region
          %s575 = sand.u32 %s37, 1
          %s576 = scalar_lea.sflag [#allocation7], %s575
          %s577 = sand.u32 %s132, 1
          %s578 = smul.addr %s577, 512
          %s579 = scalar_lea.vmem [#allocation8], %s578
          %s580 = smul.u32 64, %s46
          %s582 = ssub.s32 8192, 8192
          %583 = vsyncadd %s576, %s582
          %s584 = smul.addr %s580, 2
          %s585 = smul.addr %s584, 64
          %s586 = scalar_lea.hbm %s2, %s585
          %s587 = sshll.u32 %s579, 4
          %s588 = int_to_ptr.vmem [resolvable:$true] %s587
          %593 = dma.hbm_to_vmem [thread:$0]  %s586, 8192, %s588, %s576, 128, 128, 8
        $region64: #{tpu_custom_call.1} parent=51 // pred_fallthru
          _
      $region52: #{tpu_custom_call.1} parent=5 // pred_fallthru
        _
      %p594 = scmp.le.s32.totalorder 1, %s37
      %p595 = scmp.lt.s32.totalorder %s37, 5
      %p596 = pnand %p594, %p595
      %p597 = pneg %p596
      // Predicated region
      $region65: #{tpu_custom_call.1} parent=5 // pred_check
        _
      $region66: #{tpu_custom_call.1} parent=5 // pred_check_branch
        %599 = sbr.rel (%p596) target = $region68
      $region67: #{tpu_custom_call.1} parent=5 // pred_region
        %s600 = ssub.s32 %s37, 1
        %s601 = sand.u32 %s77, 1
        %s602 = scalar_lea.sflag [#allocation4], %s601
        %s603 = sand.u32 %s77, 1
        %s604 = smul.addr %s603, 64
        %s605 = scalar_lea.vmem [#allocation3], %s604
        // Predicated region
        $region69: #{tpu_custom_call.1} parent=67 // pred_check
          %p606 = pneg %p90
        $region70: #{tpu_custom_call.1} parent=67 // pred_check_branch
          %608 = sbr.rel (%p606) target = $region72
        $region71: #{tpu_custom_call.1} parent=67 // pred_region
          %609 = dma.done %s602, 1024
        $region72: #{tpu_custom_call.1} parent=67 // pred_fallthru
          _
        %s610 = sand.u32 %s42, 1
        %s611 = scalar_lea.sflag [#allocation7], %s610
        %s612 = sand.u32 %s109, 1
        %s613 = smul.addr %s612, 64
        %s614 = scalar_lea.vmem [#allocation6], %s613
        // Predicated region
        $region73: #{tpu_custom_call.1} parent=67 // pred_check
          %p615 = pneg %p122
        $region74: #{tpu_custom_call.1} parent=67 // pred_check_branch
          %617 = sbr.rel (%p615) target = $region76
        $region75: #{tpu_custom_call.1} parent=67 // pred_region
          %618 = dma.done %s611, 1024
        $region76: #{tpu_custom_call.1} parent=67 // pred_fallthru
          _
        %s619 = sand.u32 %s42, 1
        %s620 = scalar_lea.sflag [#allocation7], %s619
        %s621 = sand.u32 %s135, 1
        %s622 = smul.addr %s621, 512
        %s623 = scalar_lea.vmem [#allocation8], %s622
        // Predicated region
        $region77: #{tpu_custom_call.1} parent=67 // pred_check
          %p624 = pneg %p148
        $region78: #{tpu_custom_call.1} parent=67 // pred_check_branch
          %626 = sbr.rel (%p624) target = $region80
        $region79: #{tpu_custom_call.1} parent=67 // pred_region
          %627 = dma.done %s620, 8192
        $region80: #{tpu_custom_call.1} parent=67 // pred_fallthru
          _
        // Predicated region
        $region81: #{tpu_custom_call.1} parent=67 // pred_check
          %p628 = pneg %p169
        $region82: #{tpu_custom_call.1} parent=67 // pred_check_branch
          %630 = sbr.rel (%p628) target = $region84
        $region83: #{tpu_custom_call.1} parent=67 // pred_region
          %631 = dma.done [#allocation10], 32
        $region84: #{tpu_custom_call.1} parent=67 // pred_fallthru
          _
        // Predicated region
        $region85: #{tpu_custom_call.1} parent=67 // pred_check
          %p632 = pneg %p190
        $region86: #{tpu_custom_call.1} parent=67 // pred_check_branch
          %634 = sbr.rel (%p632) target = $region88
        $region87: #{tpu_custom_call.1} parent=67 // pred_region
          %635 = dma.done [#allocation10], 4096
        $region88: #{tpu_custom_call.1} parent=67 // pred_fallthru
          _
        // Predicated region
        $region89: #{tpu_custom_call.1} parent=67 // pred_check
          %p636 = pneg %p211
        $region90: #{tpu_custom_call.1} parent=67 // pred_check_branch
          %638 = sbr.rel (%p636) target = $region92
        $region91: #{tpu_custom_call.1} parent=67 // pred_region
          %639 = dma.done [#allocation13], 32
        $region92: #{tpu_custom_call.1} parent=67 // pred_fallthru
          _
        // Predicated region
        $region93: #{tpu_custom_call.1} parent=67 // pred_check
          %p640 = pneg %p232
        $region94: #{tpu_custom_call.1} parent=67 // pred_check_branch
          %642 = sbr.rel (%p640) target = $region96
        $region95: #{tpu_custom_call.1} parent=67 // pred_region
          %643 = dma.done [#allocation13], 2048
        $region96: #{tpu_custom_call.1} parent=67 // pred_fallthru
          _
        // Predicated region
        $region97: #{tpu_custom_call.1} parent=67 // pred_check
          %p644 = pneg %p253
        $region98: #{tpu_custom_call.1} parent=67 // pred_check_branch
          %646 = sbr.rel (%p644) target = $region100
        $region99: #{tpu_custom_call.1} parent=67 // pred_region
          %647 = dma.done [#allocation16], 16
        $region100: #{tpu_custom_call.1} parent=67 // pred_fallthru
          _
        // Predicated region
        $region101: #{tpu_custom_call.1} parent=67 // pred_check
          %p648 = pneg %p274
        $region102: #{tpu_custom_call.1} parent=67 // pred_check_branch
          %650 = sbr.rel (%p648) target = $region104
        $region103: #{tpu_custom_call.1} parent=67 // pred_region
          %651 = dma.done [#allocation16], 4096
        $region104: #{tpu_custom_call.1} parent=67 // pred_fallthru
          _
        // Predicated region
        $region105: #{tpu_custom_call.1} parent=67 // pred_check
          %p652 = pneg %p295
        $region106: #{tpu_custom_call.1} parent=67 // pred_check_branch
          %654 = sbr.rel (%p652) target = $region108
        $region107: #{tpu_custom_call.1} parent=67 // pred_region
          %655 = dma.done [#allocation19], 32
        $region108: #{tpu_custom_call.1} parent=67 // pred_fallthru
          _
        // Predicated region
        $region109: #{tpu_custom_call.1} parent=67 // pred_check
          %p656 = pneg %p316
        $region110: #{tpu_custom_call.1} parent=67 // pred_check_branch
          %658 = sbr.rel (%p656) target = $region112
        $region111: #{tpu_custom_call.1} parent=67 // pred_region
          %659 = dma.done [#allocation19], 2048
        $region112: #{tpu_custom_call.1} parent=67 // pred_fallthru
          _
        // Predicated region
        $region113: #{tpu_custom_call.1} parent=67 // pred_check
          %p660 = pneg %p337
        $region114: #{tpu_custom_call.1} parent=67 // pred_check_branch
          %662 = sbr.rel (%p660) target = $region116
        $region115: #{tpu_custom_call.1} parent=67 // pred_region
          %663 = dma.done [#allocation22], 16
        $region116: #{tpu_custom_call.1} parent=67 // pred_fallthru
          _
        %s664 = sand.u32 %s77, 1
        %s665 = scalar_lea.sflag [#allocation4], %s664
        %s666 = sand.u32 %s77, 1
        %s667 = smul.addr %s666, 64
        %s668 = scalar_lea.vmem [#allocation3], %s667
        %p669 = pneg %p90
        %p670 = pneg %p87
        %s671 = sand.u32 %s42, 1
        %s672 = scalar_lea.sflag [#allocation7], %s671
        %s673 = sand.u32 %s109, 1
        %s674 = smul.addr %s673, 64
        %s675 = scalar_lea.vmem [#allocation6], %s674
        %p676 = pneg %p122
        %p677 = pneg %p119
        %s678 = sand.u32 %s42, 1
        %s679 = scalar_lea.sflag [#allocation7], %s678
        %s680 = sand.u32 %s135, 1
        %s681 = smul.addr %s680, 512
        %s682 = scalar_lea.vmem [#allocation8], %s681
        %p683 = pneg %p148
        %p684 = pneg %p145
        %p685 = pneg %p169
        %p686 = pneg %p166
        %p687 = pneg %p190
        %p688 = pneg %p187
        %p689 = pneg %p211
        %p690 = pneg %p208
        %p691 = pneg %p232
        %p692 = pneg %p229
        %p693 = pneg %p253
        %p694 = pneg %p250
        %p695 = pneg %p274
        %p696 = pneg %p271
        %p697 = pneg %p295
        %p698 = pneg %p292
        %p699 = pneg %p316
        %p700 = pneg %p313
        %p701 = pneg %p337
        %p702 = pneg %p334
        %p703 = pneg %p365
        %p704 = pneg %p362
        %s705 = sand.u32 %s352, 1
        %s706 = scalar_lea.sflag [#allocation5], %s705
        %s707 = sand.u32 %s352, 1
        %s708 = smul.addr %s707, 8
        %s709 = scalar_lea.vmem [#allocation23], %s708
        %p710 = pneg %p393
        %p711 = pneg %p390
        %s712 = sand.u32 %s380, 1
        %s713 = scalar_lea.sflag [#allocation25], %s712
        %s714 = sand.u32 %s380, 1
        %s715 = smul.addr %s714, 8
        %s716 = scalar_lea.vmem [#allocation24], %s715
        %s717 = ssub.s32 1, %s47
        %s718 = smul.u32 %s48, %s717
        %s719 = smul.u32 %s49, %s717
        %s720 = smul.u32 2, %s718
        %s721 = smul.u32 4, %s719
        %s722 = smul.u32 %s48, %s47
        %s723 = smul.u32 %s49, %s47
        %s724 = smul.u32 2, %s722
        %s725 = smul.u32 4, %s723
        %s726 = smul.u32 64, %s49
        %s727 = sadd.s32 %s47, %s48
        %s728 = smul.u32 2, %s727
        %s729 = sadd.s32 %s47, %s48
        %s730 = smul.u32 2, %s729
        %p732 = scmp.eq.s32.totalorder %s49, 0
        // Predicated region
        $region117: #{tpu_custom_call.1} parent=67 // pred_check
          %p733 = pneg %p732
        $region118: #{tpu_custom_call.1} parent=67 // pred_check_branch
          %735 = sbr.rel (%p733) target = $region120
        $region119: #{tpu_custom_call.1} parent=67 // pred_region
          %736 = vst [vmem:[#allocation2] sm:$0xff] 0.0
          %737 = vst [vmem:[#allocation2 + $0x8] sm:$0xff] 0.0
          %738 = vst [vmem:[#allocation2 + $0x10] sm:$0xff] 0.0
          %739 = vst [vmem:[#allocation2 + $0x18] sm:$0xff] 0.0
        $region120: #{tpu_custom_call.1} parent=67 // pred_fallthru
          _
        %p740 = scmp.eq.s32.totalorder %s47, 0
        %v741 = vld [vmem:[%s605] sm:$0xff]
        %v742 = vld [vmem:[%s605 + $0x8] sm:$0xff]
        %v743 = vld [vmem:[%s605 + $0x10] sm:$0xff]
        %v744 = vld [vmem:[%s605 + $0x18] sm:$0xff]
        %v745 = vld [vmem:[%s605 + $0x20] sm:$0xff]
        %v746 = vld [vmem:[%s605 + $0x28] sm:$0xff]
        %v747 = vld [vmem:[%s605 + $0x30] sm:$0xff]
        %v748 = vld [vmem:[%s605 + $0x38] sm:$0xff]
        %v749 = vld [vmem:[%s614] sm:$0xff]
        %v750 = vld [vmem:[%s614 + $0x8] sm:$0xff]
        %v751 = vld [vmem:[%s614 + $0x10] sm:$0xff]
        %v752 = vld [vmem:[%s614 + $0x18] sm:$0xff]
        %v753 = vld [vmem:[%s614 + $0x20] sm:$0xff]
        %v754 = vld [vmem:[%s614 + $0x28] sm:$0xff]
        %v755 = vld [vmem:[%s614 + $0x30] sm:$0xff]
        %v756 = vld [vmem:[%s614 + $0x38] sm:$0xff]
        %s757 = scalar_select %p740, 1, 0
        %v758 = vstv %s757
        %vm759 = vcmp.eq.s32.totalorder %v758, 1
        %v760 = vsel %vm759, %v741, %v749
        %v761 = vsel %vm759, %v742, %v750
        %v762 = vsel %vm759, %v743, %v751
        %v763 = vsel %vm759, %v744, %v752
        %v764 = vsel %vm759, %v745, %v753
        %v765 = vsel %vm759, %v746, %v754
        %v766 = vsel %vm759, %v747, %v755
        %v767 = vsel %vm759, %v748, %v756
        %v768 = vpack.c.bf16 %v764, %v760
        %v769 = vpack.c.bf16 %v765, %v761
        %v770 = vpack.c.bf16 %v766, %v762
        %v771 = vpack.c.bf16 %v767, %v763
        %v772 = vld [vmem:[#allocation2] sm:$0xff]
        %v773 = vld [vmem:[#allocation2 + $0x8] sm:$0xff]
        %v774 = vld [vmem:[#allocation2 + $0x10] sm:$0xff]
        %v775 = vld [vmem:[#allocation2 + $0x18] sm:$0xff]
        %v776 = vld [vmem:[%s623] sm:$0xff]
        %v777 = vld [vmem:[%s623 + $0x8] sm:$0xff]
        %v778 = vld [vmem:[%s623 + $0x10] sm:$0xff]
        %v779 = vld [vmem:[%s623 + $0x18] sm:$0xff]
        %v780 = vld [vmem:[%s623 + $0x20] sm:$0xff]
        %v781 = vld [vmem:[%s623 + $0x28] sm:$0xff]
        %v782 = vld [vmem:[%s623 + $0x30] sm:$0xff]
        %v783 = vld [vmem:[%s623 + $0x38] sm:$0xff]
        %v784 = vld [vmem:[%s623 + $0x40] sm:$0xff]
        %v785 = vld [vmem:[%s623 + $0x48] sm:$0xff]
        %v786 = vld [vmem:[%s623 + $0x50] sm:$0xff]
        %v787 = vld [vmem:[%s623 + $0x58] sm:$0xff]
        %v788 = vld [vmem:[%s623 + $0x60] sm:$0xff]
        %v789 = vld [vmem:[%s623 + $0x68] sm:$0xff]
        %v790 = vld [vmem:[%s623 + $0x70] sm:$0xff]
        %v791 = vld [vmem:[%s623 + $0x78] sm:$0xff]
        %v792 = vld [vmem:[%s623 + $0x80] sm:$0xff]
        %v793 = vld [vmem:[%s623 + $0x88] sm:$0xff]
        %v794 = vld [vmem:[%s623 + $0x90] sm:$0xff]
        %v795 = vld [vmem:[%s623 + $0x98] sm:$0xff]
        %v796 = vld [vmem:[%s623 + $0xa0] sm:$0xff]
        %v797 = vld [vmem:[%s623 + $0xa8] sm:$0xff]
        %v798 = vld [vmem:[%s623 + $0xb0] sm:$0xff]
        %v799 = vld [vmem:[%s623 + $0xb8] sm:$0xff]
        %v800 = vld [vmem:[%s623 + $0xc0] sm:$0xff]
        %v801 = vld [vmem:[%s623 + $0xc8] sm:$0xff]
        %v802 = vld [vmem:[%s623 + $0xd0] sm:$0xff]
        %v803 = vld [vmem:[%s623 + $0xd8] sm:$0xff]
        %v804 = vld [vmem:[%s623 + $0xe0] sm:$0xff]
        %v805 = vld [vmem:[%s623 + $0xe8] sm:$0xff]
        %v806 = vld [vmem:[%s623 + $0xf0] sm:$0xff]
        %v807 = vld [vmem:[%s623 + $0xf8] sm:$0xff]
        %v808 = vld [vmem:[%s623 + $0x100] sm:$0xff]
        %v809 = vld [vmem:[%s623 + $0x108] sm:$0xff]
        %v810 = vld [vmem:[%s623 + $0x110] sm:$0xff]
        %v811 = vld [vmem:[%s623 + $0x118] sm:$0xff]
        %v812 = vld [vmem:[%s623 + $0x120] sm:$0xff]
        %v813 = vld [vmem:[%s623 + $0x128] sm:$0xff]
        %v814 = vld [vmem:[%s623 + $0x130] sm:$0xff]
        %v815 = vld [vmem:[%s623 + $0x138] sm:$0xff]
        %v816 = vld [vmem:[%s623 + $0x140] sm:$0xff]
        %v817 = vld [vmem:[%s623 + $0x148] sm:$0xff]
        %v818 = vld [vmem:[%s623 + $0x150] sm:$0xff]
        %v819 = vld [vmem:[%s623 + $0x158] sm:$0xff]
        %v820 = vld [vmem:[%s623 + $0x160] sm:$0xff]
        %v821 = vld [vmem:[%s623 + $0x168] sm:$0xff]
        %v822 = vld [vmem:[%s623 + $0x170] sm:$0xff]
        %v823 = vld [vmem:[%s623 + $0x178] sm:$0xff]
        %v824 = vld [vmem:[%s623 + $0x180] sm:$0xff]
        %v825 = vld [vmem:[%s623 + $0x188] sm:$0xff]
        %v826 = vld [vmem:[%s623 + $0x190] sm:$0xff]
        %v827 = vld [vmem:[%s623 + $0x198] sm:$0xff]
        %v828 = vld [vmem:[%s623 + $0x1a0] sm:$0xff]
        %v829 = vld [vmem:[%s623 + $0x1a8] sm:$0xff]
        %v830 = vld [vmem:[%s623 + $0x1b0] sm:$0xff]
        %v831 = vld [vmem:[%s623 + $0x1b8] sm:$0xff]
        %v832 = vld [vmem:[%s623 + $0x1c0] sm:$0xff]
        %v833 = vld [vmem:[%s623 + $0x1c8] sm:$0xff]
        %v834 = vld [vmem:[%s623 + $0x1d0] sm:$0xff]
        %v835 = vld [vmem:[%s623 + $0x1d8] sm:$0xff]
        %v836 = vld [vmem:[%s623 + $0x1e0] sm:$0xff]
        %v837 = vld [vmem:[%s623 + $0x1e8] sm:$0xff]
        %v838 = vld [vmem:[%s623 + $0x1f0] sm:$0xff]
        %v839 = vld [vmem:[%s623 + $0x1f8] sm:$0xff]
        %v904 = vunpack.c.l.b16 %v776
        %v905 = vunpack.c.h.b16 %v776
        %v906 = vunpack.c.l.b16 %v777
        %v907 = vunpack.c.h.b16 %v777
        %v908 = vunpack.c.l.b16 %v778
        %v909 = vunpack.c.h.b16 %v778
        %v910 = vunpack.c.l.b16 %v779
        %v911 = vunpack.c.h.b16 %v779
        %v912 = vunpack.c.l.b16 %v780
        %v913 = vunpack.c.h.b16 %v780
        %v914 = vunpack.c.l.b16 %v781
        %v915 = vunpack.c.h.b16 %v781
        %v916 = vunpack.c.l.b16 %v782
        %v917 = vunpack.c.h.b16 %v782
        %v918 = vunpack.c.l.b16 %v783
        %v919 = vunpack.c.h.b16 %v783
        %v920 = vunpack.c.l.b16 %v784
        %v921 = vunpack.c.h.b16 %v784
        %v922 = vunpack.c.l.b16 %v785
        %v923 = vunpack.c.h.b16 %v785
        %v924 = vunpack.c.l.b16 %v786
        %v925 = vunpack.c.h.b16 %v786
        %v926 = vunpack.c.l.b16 %v787
        %v927 = vunpack.c.h.b16 %v787
        %v928 = vunpack.c.l.b16 %v788
        %v929 = vunpack.c.h.b16 %v788
        %v930 = vunpack.c.l.b16 %v789
        %v931 = vunpack.c.h.b16 %v789
        %v932 = vunpack.c.l.b16 %v790
        %v933 = vunpack.c.h.b16 %v790
        %v934 = vunpack.c.l.b16 %v791
        %v935 = vunpack.c.h.b16 %v791
        %v936 = vunpack.c.l.b16 %v792
        %v937 = vunpack.c.h.b16 %v792
        %v938 = vunpack.c.l.b16 %v793
        %v939 = vunpack.c.h.b16 %v793
        %v940 = vunpack.c.l.b16 %v794
        %v941 = vunpack.c.h.b16 %v794
        %v942 = vunpack.c.l.b16 %v795
        %v943 = vunpack.c.h.b16 %v795
        %v944 = vunpack.c.l.b16 %v796
        %v945 = vunpack.c.h.b16 %v796
        %v946 = vunpack.c.l.b16 %v797
        %v947 = vunpack.c.h.b16 %v797
        %v948 = vunpack.c.l.b16 %v798
        %v949 = vunpack.c.h.b16 %v798
        %v950 = vunpack.c.l.b16 %v799
        %v951 = vunpack.c.h.b16 %v799
        %v952 = vunpack.c.l.b16 %v800
        %v953 = vunpack.c.h.b16 %v800
        %v954 = vunpack.c.l.b16 %v801
        %v955 = vunpack.c.h.b16 %v801
        %v956 = vunpack.c.l.b16 %v802
        %v957 = vunpack.c.h.b16 %v802
        %v958 = vunpack.c.l.b16 %v803
        %v959 = vunpack.c.h.b16 %v803
        %v960 = vunpack.c.l.b16 %v804
        %v961 = vunpack.c.h.b16 %v804
        %v962 = vunpack.c.l.b16 %v805
        %v963 = vunpack.c.h.b16 %v805
        %v964 = vunpack.c.l.b16 %v806
        %v965 = vunpack.c.h.b16 %v806
        %v966 = vunpack.c.l.b16 %v807
        %v967 = vunpack.c.h.b16 %v807
        %v968 = vunpack.c.l.b16 %v808
        %v969 = vunpack.c.h.b16 %v808
        %v970 = vunpack.c.l.b16 %v809
        %v971 = vunpack.c.h.b16 %v809
        %v972 = vunpack.c.l.b16 %v810
        %v973 = vunpack.c.h.b16 %v810
        %v974 = vunpack.c.l.b16 %v811
        %v975 = vunpack.c.h.b16 %v811
        %v976 = vunpack.c.l.b16 %v812
        %v977 = vunpack.c.h.b16 %v812
        %v978 = vunpack.c.l.b16 %v813
        %v979 = vunpack.c.h.b16 %v813
        %v980 = vunpack.c.l.b16 %v814
        %v981 = vunpack.c.h.b16 %v814
        %v982 = vunpack.c.l.b16 %v815
        %v983 = vunpack.c.h.b16 %v815
        %v984 = vunpack.c.l.b16 %v816
        %v985 = vunpack.c.h.b16 %v816
        %v986 = vunpack.c.l.b16 %v817
        %v987 = vunpack.c.h.b16 %v817
        %v988 = vunpack.c.l.b16 %v818
        %v989 = vunpack.c.h.b16 %v818
        %v990 = vunpack.c.l.b16 %v819
        %v991 = vunpack.c.h.b16 %v819
        %v992 = vunpack.c.l.b16 %v820
        %v993 = vunpack.c.h.b16 %v820
        %v994 = vunpack.c.l.b16 %v821
        %v995 = vunpack.c.h.b16 %v821
        %v996 = vunpack.c.l.b16 %v822
        %v997 = vunpack.c.h.b16 %v822
        %v998 = vunpack.c.l.b16 %v823
        %v999 = vunpack.c.h.b16 %v823
        %v1000 = vunpack.c.l.b16 %v824
        %v1001 = vunpack.c.h.b16 %v824
        %v1002 = vunpack.c.l.b16 %v825
        %v1003 = vunpack.c.h.b16 %v825
        %v1004 = vunpack.c.l.b16 %v826
        %v1005 = vunpack.c.h.b16 %v826
        %v1006 = vunpack.c.l.b16 %v827
        %v1007 = vunpack.c.h.b16 %v827
        %v1008 = vunpack.c.l.b16 %v828
        %v1009 = vunpack.c.h.b16 %v828
        %v1010 = vunpack.c.l.b16 %v829
        %v1011 = vunpack.c.h.b16 %v829
        %v1012 = vunpack.c.l.b16 %v830
        %v1013 = vunpack.c.h.b16 %v830
        %v1014 = vunpack.c.l.b16 %v831
        %v1015 = vunpack.c.h.b16 %v831
        %v1016 = vunpack.c.l.b16 %v832
        %v1017 = vunpack.c.h.b16 %v832
        %v1018 = vunpack.c.l.b16 %v833
        %v1019 = vunpack.c.h.b16 %v833
        %v1020 = vunpack.c.l.b16 %v834
        %v1021 = vunpack.c.h.b16 %v834
        %v1022 = vunpack.c.l.b16 %v835
        %v1023 = vunpack.c.h.b16 %v835
        %v1024 = vunpack.c.l.b16 %v836
        %v1025 = vunpack.c.h.b16 %v836
        %v1026 = vunpack.c.l.b16 %v837
        %v1027 = vunpack.c.h.b16 %v837
        %v1028 = vunpack.c.l.b16 %v838
        %v1029 = vunpack.c.h.b16 %v838
        %v1030 = vunpack.c.l.b16 %v839
        %v1031 = vunpack.c.h.b16 %v839
        %v1032 = vpack.c.b16 %v906, %v904
        %v1033 = vpack.c.b16 %v907, %v905
        %v1034 = vpack.c.b16 %v910, %v908
        %v1035 = vpack.c.b16 %v911, %v909
        %v1036 = vpack.c.b16 %v914, %v912
        %v1037 = vpack.c.b16 %v915, %v913
        %v1038 = vpack.c.b16 %v918, %v916
        %v1039 = vpack.c.b16 %v919, %v917
        %v1040 = vpack.c.b16 %v922, %v920
        %v1041 = vpack.c.b16 %v923, %v921
        %v1042 = vpack.c.b16 %v926, %v924
        %v1043 = vpack.c.b16 %v927, %v925
        %v1044 = vpack.c.b16 %v930, %v928
        %v1045 = vpack.c.b16 %v931, %v929
        %v1046 = vpack.c.b16 %v934, %v932
        %v1047 = vpack.c.b16 %v935, %v933
        %v1048 = vpack.c.b16 %v938, %v936
        %v1049 = vpack.c.b16 %v939, %v937
        %v1050 = vpack.c.b16 %v942, %v940
        %v1051 = vpack.c.b16 %v943, %v941
        %v1052 = vpack.c.b16 %v946, %v944
        %v1053 = vpack.c.b16 %v947, %v945
        %v1054 = vpack.c.b16 %v950, %v948
        %v1055 = vpack.c.b16 %v951, %v949
        %v1056 = vpack.c.b16 %v954, %v952
        %v1057 = vpack.c.b16 %v955, %v953
        %v1058 = vpack.c.b16 %v958, %v956
        %v1059 = vpack.c.b16 %v959, %v957
        %v1060 = vpack.c.b16 %v962, %v960
        %v1061 = vpack.c.b16 %v963, %v961
        %v1062 = vpack.c.b16 %v966, %v964
        %v1063 = vpack.c.b16 %v967, %v965
        %v1064 = vpack.c.b16 %v970, %v968
        %v1065 = vpack.c.b16 %v971, %v969
        %v1066 = vpack.c.b16 %v974, %v972
        %v1067 = vpack.c.b16 %v975, %v973
        %v1068 = vpack.c.b16 %v978, %v976
        %v1069 = vpack.c.b16 %v979, %v977
        %v1070 = vpack.c.b16 %v982, %v980
        %v1071 = vpack.c.b16 %v983, %v981
        %v1072 = vpack.c.b16 %v986, %v984
        %v1073 = vpack.c.b16 %v987, %v985
        %v1074 = vpack.c.b16 %v990, %v988
        %v1075 = vpack.c.b16 %v991, %v989
        %v1076 = vpack.c.b16 %v994, %v992
        %v1077 = vpack.c.b16 %v995, %v993
        %v1078 = vpack.c.b16 %v998, %v996
        %v1079 = vpack.c.b16 %v999, %v997
        %v1080 = vpack.c.b16 %v1002, %v1000
        %v1081 = vpack.c.b16 %v1003, %v1001
        %v1082 = vpack.c.b16 %v1006, %v1004
        %v1083 = vpack.c.b16 %v1007, %v1005
        %v1084 = vpack.c.b16 %v1010, %v1008
        %v1085 = vpack.c.b16 %v1011, %v1009
        %v1086 = vpack.c.b16 %v1014, %v1012
        %v1087 = vpack.c.b16 %v1015, %v1013
        %v1088 = vpack.c.b16 %v1018, %v1016
        %v1089 = vpack.c.b16 %v1019, %v1017
        %v1090 = vpack.c.b16 %v1022, %v1020
        %v1091 = vpack.c.b16 %v1023, %v1021
        %v1092 = vpack.c.b16 %v1026, %v1024
        %v1093 = vpack.c.b16 %v1027, %v1025
        %v1094 = vpack.c.b16 %v1030, %v1028
        %v1095 = vpack.c.b16 %v1031, %v1029
        %1160 = vmatprep.subr.bf16.mxu0 %v1033
        %1161 = vmatpush1.bf16.msra.mxu0 %v1032
        %1162 = vmatprep.subr.bf16.mxu0 %v1035
        %1163 = vmatpush1.bf16.msra.mxu0 %v1034
        %1164 = vmatprep.subr.bf16.mxu0 %v1037
        %1165 = vmatpush1.bf16.msra.mxu0 %v1036
        %1166 = vmatprep.subr.bf16.mxu0 %v1039
        %1167 = vmatpush1.bf16.msra.mxu0 %v1038
        %1168 = vmatprep.subr.bf16.mxu0 %v1041
        %1169 = vmatpush1.bf16.msra.mxu0 %v1040
        %1170 = vmatprep.subr.bf16.mxu0 %v1043
        %1171 = vmatpush1.bf16.msra.mxu0 %v1042
        %1172 = vmatprep.subr.bf16.mxu0 %v1045
        %1173 = vmatpush1.bf16.msra.mxu0 %v1044
        %1174 = vmatprep.subr.bf16.mxu0 %v1047
        %1175 = vmatpush1.bf16.msra.mxu0 %v1046
        %1176 = vmatprep.subr.bf16.mxu0 %v1049
        %1177 = vmatpush1.bf16.msra.mxu0 %v1048
        %1178 = vmatprep.subr.bf16.mxu0 %v1051
        %1179 = vmatpush1.bf16.msra.mxu0 %v1050
        %1180 = vmatprep.subr.bf16.mxu0 %v1053
        %1181 = vmatpush1.bf16.msra.mxu0 %v1052
        %1182 = vmatprep.subr.bf16.mxu0 %v1055
        %1183 = vmatpush1.bf16.msra.mxu0 %v1054
        %1184 = vmatprep.subr.bf16.mxu0 %v1057
        %1185 = vmatpush1.bf16.msra.mxu0 %v1056
        %1186 = vmatprep.subr.bf16.mxu0 %v1059
        %1187 = vmatpush1.bf16.msra.mxu0 %v1058
        %1188 = vmatprep.subr.bf16.mxu0 %v1061
        %1189 = vmatpush1.bf16.msra.mxu0 %v1060
        %1190 = vmatprep.subr.bf16.mxu0 %v1063
        %1191 = vmatpush1.bf16.msra.mxu0 %v1062
        %1192 = vmatprep.mubr.bf16.mxu0 %v769
        %1193 = vmatmul.mubr.bf16.gmra.mrb[0].mxu0 %v768
        %v1194 = vpop.f32.mrb[0].mxu0
        %v1195 = vadd.f32 0.0, %v1194
        %v1196 = vpop.f32.mrb[0].mxu0
        %v1197 = vadd.f32 0.0, %v1196
        %v1198 = vpop.f32.mrb[0].mxu0
        %v1199 = vadd.f32 0.0, %v1198
        %v1200 = vpop.f32.mrb[0].mxu0
        %v1201 = vadd.f32 0.0, %v1200
        %1202 = vdwg.mxu0
        %1203 = vmatprep.subr.bf16.mxu0 %v1065
        %1204 = vmatpush1.bf16.msra.mxu0 %v1064
        %1205 = vmatprep.subr.bf16.mxu0 %v1067
        %1206 = vmatpush1.bf16.msra.mxu0 %v1066
        %1207 = vmatprep.subr.bf16.mxu0 %v1069
        %1208 = vmatpush1.bf16.msra.mxu0 %v1068
        %1209 = vmatprep.subr.bf16.mxu0 %v1071
        %1210 = vmatpush1.bf16.msra.mxu0 %v1070
        %1211 = vmatprep.subr.bf16.mxu0 %v1073
        %1212 = vmatpush1.bf16.msra.mxu0 %v1072
        %1213 = vmatprep.subr.bf16.mxu0 %v1075
        %1214 = vmatpush1.bf16.msra.mxu0 %v1074
        %1215 = vmatprep.subr.bf16.mxu0 %v1077
        %1216 = vmatpush1.bf16.msra.mxu0 %v1076
        %1217 = vmatprep.subr.bf16.mxu0 %v1079
        %1218 = vmatpush1.bf16.msra.mxu0 %v1078
        %1219 = vmatprep.subr.bf16.mxu0 %v1081
        %1220 = vmatpush1.bf16.msra.mxu0 %v1080
        %1221 = vmatprep.subr.bf16.mxu0 %v1083
        %1222 = vmatpush1.bf16.msra.mxu0 %v1082
        %1223 = vmatprep.subr.bf16.mxu0 %v1085
        %1224 = vmatpush1.bf16.msra.mxu0 %v1084
        %1225 = vmatprep.subr.bf16.mxu0 %v1087
        %1226 = vmatpush1.bf16.msra.mxu0 %v1086
        %1227 = vmatprep.subr.bf16.mxu0 %v1089
        %1228 = vmatpush1.bf16.msra.mxu0 %v1088
        %1229 = vmatprep.subr.bf16.mxu0 %v1091
        %1230 = vmatpush1.bf16.msra.mxu0 %v1090
        %1231 = vmatprep.subr.bf16.mxu0 %v1093
        %1232 = vmatpush1.bf16.msra.mxu0 %v1092
        %1233 = vmatprep.subr.bf16.mxu0 %v1095
        %1234 = vmatpush1.bf16.msra.mxu0 %v1094
        %1235 = vmatprep.mubr.bf16.mxu0 %v771
        %1236 = vmatmul.mubr.bf16.gmra.mrb[0].mxu0 %v770
        %v1237 = vpop.f32.mrb[0].mxu0
        %v1238 = vadd.f32 %v1195, %v1237
        %v1239 = vpop.f32.mrb[0].mxu0
        %v1240 = vadd.f32 %v1197, %v1239
        %v1241 = vpop.f32.mrb[0].mxu0
        %v1242 = vadd.f32 %v1199, %v1241
        %v1243 = vpop.f32.mrb[0].mxu0
        %v1244 = vadd.f32 %v1201, %v1243
        %1245 = vdwg.mxu0
        %v1246 = vadd.f32 %v772, %v1238
        %v1247 = vadd.f32 %v773, %v1240
        %v1248 = vadd.f32 %v774, %v1242
        %v1249 = vadd.f32 %v775, %v1244
        %1250 = vst [vmem:[#allocation2] sm:$0xff] %v1246
        %1251 = vst [vmem:[#allocation2 + $0x8] sm:$0xff] %v1247
        %1252 = vst [vmem:[#allocation2 + $0x10] sm:$0xff] %v1248
        %1253 = vst [vmem:[#allocation2 + $0x18] sm:$0xff] %v1249
        %p1254 = scmp.eq.s32.totalorder %s49, 1
        // Predicated region
        $region121: #{tpu_custom_call.1} parent=67 // pred_check
          %p1255 = pneg %p1254
        $region122: #{tpu_custom_call.1} parent=67 // pred_check_branch
          %1257 = sbr.rel (%p1255) target = $region124
        $region123: #{tpu_custom_call.1} parent=67 // pred_region
          %v1258 = vld [vmem:[#allocation2] sm:$0xff]
          %v1259 = vld [vmem:[#allocation2 + $0x8] sm:$0xff]
          %v1260 = vld [vmem:[#allocation2 + $0x10] sm:$0xff]
          %v1261 = vld [vmem:[#allocation2 + $0x18] sm:$0xff]
          %v1262 = vld [vmem:[#allocation9] sm:$0x3]
          %v1264 = vlaneseq
          %v1265 = vshrl.u32 %v1264, 7
          %v1266 = vsub.s32 0, %v1265
          %v1267 = vrot.slane %v1262, %v1266
          %v1268 = vlaneseq
          %v1269 = vshrl.u32 %v1268, 7
          %v1270 = vsub.s32 1, %v1269
          %v1271 = vrot.slane %v1262, %v1270
          %v1274 = vadd.f32 %v1258, %v1267
          %v1275 = vadd.f32 %v1259, %v1271
          %v1276 = vadd.f32 %v1260, %v1267
          %v1277 = vadd.f32 %v1261, %v1271
          %v1278 = vmax.f32 %v1274, 0.0
          %v1279 = vmax.f32 %v1275, 0.0
          %v1280 = vmax.f32 %v1276, 0.0
          %v1281 = vmax.f32 %v1277, 0.0
          %v1282 = vpack.c.bf16 %v1280, %v1278
          %v1283 = vpack.c.bf16 %v1281, %v1279
          %v1284 = vld [vmem:[#allocation11] sm:$0xff]
          %v1285 = vld [vmem:[#allocation11 + $0x8] sm:$0xff]
          %v1286 = vld [vmem:[#allocation11 + $0x10] sm:$0xff]
          %v1287 = vld [vmem:[#allocation11 + $0x18] sm:$0xff]
          %v1288 = vld [vmem:[#allocation11 + $0x20] sm:$0xff]
          %v1289 = vld [vmem:[#allocation11 + $0x28] sm:$0xff]
          %v1290 = vld [vmem:[#allocation11 + $0x30] sm:$0xff]
          %v1291 = vld [vmem:[#allocation11 + $0x38] sm:$0xff]
          %v1292 = vld [vmem:[#allocation11 + $0x40] sm:$0xff]
          %v1293 = vld [vmem:[#allocation11 + $0x48] sm:$0xff]
          %v1294 = vld [vmem:[#allocation11 + $0x50] sm:$0xff]
          %v1295 = vld [vmem:[#allocation11 + $0x58] sm:$0xff]
          %v1296 = vld [vmem:[#allocation11 + $0x60] sm:$0xff]
          %v1297 = vld [vmem:[#allocation11 + $0x68] sm:$0xff]
          %v1298 = vld [vmem:[#allocation11 + $0x70] sm:$0xff]
          %v1299 = vld [vmem:[#allocation11 + $0x78] sm:$0xff]
          %v1300 = vld [vmem:[#allocation11 + $0x80] sm:$0xff]
          %v1301 = vld [vmem:[#allocation11 + $0x88] sm:$0xff]
          %v1302 = vld [vmem:[#allocation11 + $0x90] sm:$0xff]
          %v1303 = vld [vmem:[#allocation11 + $0x98] sm:$0xff]
          %v1304 = vld [vmem:[#allocation11 + $0xa0] sm:$0xff]
          %v1305 = vld [vmem:[#allocation11 + $0xa8] sm:$0xff]
          %v1306 = vld [vmem:[#allocation11 + $0xb0] sm:$0xff]
          %v1307 = vld [vmem:[#allocation11 + $0xb8] sm:$0xff]
          %v1308 = vld [vmem:[#allocation11 + $0xc0] sm:$0xff]
          %v1309 = vld [vmem:[#allocation11 + $0xc8] sm:$0xff]
          %v1310 = vld [vmem:[#allocation11 + $0xd0] sm:$0xff]
          %v1311 = vld [vmem:[#allocation11 + $0xd8] sm:$0xff]
          %v1312 = vld [vmem:[#allocation11 + $0xe0] sm:$0xff]
          %v1313 = vld [vmem:[#allocation11 + $0xe8] sm:$0xff]
          %v1314 = vld [vmem:[#allocation11 + $0xf0] sm:$0xff]
          %v1315 = vld [vmem:[#allocation11 + $0xf8] sm:$0xff]
          %v1316 = vld [vmem:[#allocation12] sm:$0x3]
          %v1318 = vlaneseq
          %v1319 = vshrl.u32 %v1318, 7
          %v1320 = vsub.s32 0, %v1319
          %v1321 = vrot.slane %v1316, %v1320
          %v1322 = vlaneseq
          %v1323 = vshrl.u32 %v1322, 7
          %v1324 = vsub.s32 1, %v1323
          %v1325 = vrot.slane %v1316, %v1324
          %v1360 = vunpack.c.l.b16 %v1284
          %v1361 = vunpack.c.h.b16 %v1284
          %v1362 = vunpack.c.l.b16 %v1285
          %v1363 = vunpack.c.h.b16 %v1285
          %v1364 = vunpack.c.l.b16 %v1286
          %v1365 = vunpack.c.h.b16 %v1286
          %v1366 = vunpack.c.l.b16 %v1287
          %v1367 = vunpack.c.h.b16 %v1287
          %v1368 = vunpack.c.l.b16 %v1288
          %v1369 = vunpack.c.h.b16 %v1288
          %v1370 = vunpack.c.l.b16 %v1289
          %v1371 = vunpack.c.h.b16 %v1289
          %v1372 = vunpack.c.l.b16 %v1290
          %v1373 = vunpack.c.h.b16 %v1290
          %v1374 = vunpack.c.l.b16 %v1291
          %v1375 = vunpack.c.h.b16 %v1291
          %v1376 = vunpack.c.l.b16 %v1292
          %v1377 = vunpack.c.h.b16 %v1292
          %v1378 = vunpack.c.l.b16 %v1293
          %v1379 = vunpack.c.h.b16 %v1293
          %v1380 = vunpack.c.l.b16 %v1294
          %v1381 = vunpack.c.h.b16 %v1294
          %v1382 = vunpack.c.l.b16 %v1295
          %v1383 = vunpack.c.h.b16 %v1295
          %v1384 = vunpack.c.l.b16 %v1296
          %v1385 = vunpack.c.h.b16 %v1296
          %v1386 = vunpack.c.l.b16 %v1297
          %v1387 = vunpack.c.h.b16 %v1297
          %v1388 = vunpack.c.l.b16 %v1298
          %v1389 = vunpack.c.h.b16 %v1298
          %v1390 = vunpack.c.l.b16 %v1299
          %v1391 = vunpack.c.h.b16 %v1299
          %v1392 = vunpack.c.l.b16 %v1300
          %v1393 = vunpack.c.h.b16 %v1300
          %v1394 = vunpack.c.l.b16 %v1301
          %v1395 = vunpack.c.h.b16 %v1301
          %v1396 = vunpack.c.l.b16 %v1302
          %v1397 = vunpack.c.h.b16 %v1302
          %v1398 = vunpack.c.l.b16 %v1303
          %v1399 = vunpack.c.h.b16 %v1303
          %v1400 = vunpack.c.l.b16 %v1304
          %v1401 = vunpack.c.h.b16 %v1304
          %v1402 = vunpack.c.l.b16 %v1305
          %v1403 = vunpack.c.h.b16 %v1305
          %v1404 = vunpack.c.l.b16 %v1306
          %v1405 = vunpack.c.h.b16 %v1306
          %v1406 = vunpack.c.l.b16 %v1307
          %v1407 = vunpack.c.h.b16 %v1307
          %v1408 = vunpack.c.l.b16 %v1308
          %v1409 = vunpack.c.h.b16 %v1308
          %v1410 = vunpack.c.l.b16 %v1309
          %v1411 = vunpack.c.h.b16 %v1309
          %v1412 = vunpack.c.l.b16 %v1310
          %v1413 = vunpack.c.h.b16 %v1310
          %v1414 = vunpack.c.l.b16 %v1311
          %v1415 = vunpack.c.h.b16 %v1311
          %v1416 = vunpack.c.l.b16 %v1312
          %v1417 = vunpack.c.h.b16 %v1312
          %v1418 = vunpack.c.l.b16 %v1313
          %v1419 = vunpack.c.h.b16 %v1313
          %v1420 = vunpack.c.l.b16 %v1314
          %v1421 = vunpack.c.h.b16 %v1314
          %v1422 = vunpack.c.l.b16 %v1315
          %v1423 = vunpack.c.h.b16 %v1315
          %v1424 = vpack.c.b16 %v1362, %v1360
          %v1425 = vpack.c.b16 %v1363, %v1361
          %v1426 = vpack.c.b16 %v1366, %v1364
          %v1427 = vpack.c.b16 %v1367, %v1365
          %v1428 = vpack.c.b16 %v1370, %v1368
          %v1429 = vpack.c.b16 %v1371, %v1369
          %v1430 = vpack.c.b16 %v1374, %v1372
          %v1431 = vpack.c.b16 %v1375, %v1373
          %v1432 = vpack.c.b16 %v1378, %v1376
          %v1433 = vpack.c.b16 %v1379, %v1377
          %v1434 = vpack.c.b16 %v1382, %v1380
          %v1435 = vpack.c.b16 %v1383, %v1381
          %v1436 = vpack.c.b16 %v1386, %v1384
          %v1437 = vpack.c.b16 %v1387, %v1385
          %v1438 = vpack.c.b16 %v1390, %v1388
          %v1439 = vpack.c.b16 %v1391, %v1389
          %v1440 = vpack.c.b16 %v1394, %v1392
          %v1441 = vpack.c.b16 %v1395, %v1393
          %v1442 = vpack.c.b16 %v1398, %v1396
          %v1443 = vpack.c.b16 %v1399, %v1397
          %v1444 = vpack.c.b16 %v1402, %v1400
          %v1445 = vpack.c.b16 %v1403, %v1401
          %v1446 = vpack.c.b16 %v1406, %v1404
          %v1447 = vpack.c.b16 %v1407, %v1405
          %v1448 = vpack.c.b16 %v1410, %v1408
          %v1449 = vpack.c.b16 %v1411, %v1409
          %v1450 = vpack.c.b16 %v1414, %v1412
          %v1451 = vpack.c.b16 %v1415, %v1413
          %v1452 = vpack.c.b16 %v1418, %v1416
          %v1453 = vpack.c.b16 %v1419, %v1417
          %v1454 = vpack.c.b16 %v1422, %v1420
          %v1455 = vpack.c.b16 %v1423, %v1421
          %1488 = vmatprep.subr.bf16.mxu0 %v1425
          %1489 = vmatpush1.bf16.msra.mxu0 %v1424
          %1490 = vmatprep.subr.bf16.mxu0 %v1427
          %1491 = vmatpush1.bf16.msra.mxu0 %v1426
          %1492 = vmatprep.subr.bf16.mxu0 %v1429
          %1493 = vmatpush1.bf16.msra.mxu0 %v1428
          %1494 = vmatprep.subr.bf16.mxu0 %v1431
          %1495 = vmatpush1.bf16.msra.mxu0 %v1430
          %1496 = vmatprep.subr.bf16.mxu0 %v1433
          %1497 = vmatpush1.bf16.msra.mxu0 %v1432
          %1498 = vmatprep.subr.bf16.mxu0 %v1435
          %1499 = vmatpush1.bf16.msra.mxu0 %v1434
          %1500 = vmatprep.subr.bf16.mxu0 %v1437
          %1501 = vmatpush1.bf16.msra.mxu0 %v1436
          %1502 = vmatprep.subr.bf16.mxu0 %v1439
          %1503 = vmatpush1.bf16.msra.mxu0 %v1438
          %1504 = vmatprep.subr.bf16.mxu0 %v1441
          %1505 = vmatpush1.bf16.msra.mxu0 %v1440
          %1506 = vmatprep.subr.bf16.mxu0 %v1443
          %1507 = vmatpush1.bf16.msra.mxu0 %v1442
          %1508 = vmatprep.subr.bf16.mxu0 %v1445
          %1509 = vmatpush1.bf16.msra.mxu0 %v1444
          %1510 = vmatprep.subr.bf16.mxu0 %v1447
          %1511 = vmatpush1.bf16.msra.mxu0 %v1446
          %1512 = vmatprep.subr.bf16.mxu0 %v1449
          %1513 = vmatpush1.bf16.msra.mxu0 %v1448
          %1514 = vmatprep.subr.bf16.mxu0 %v1451
          %1515 = vmatpush1.bf16.msra.mxu0 %v1450
          %1516 = vmatprep.subr.bf16.mxu0 %v1453
          %1517 = vmatpush1.bf16.msra.mxu0 %v1452
          %1518 = vmatprep.subr.bf16.mxu0 %v1455
          %1519 = vmatpush1.bf16.msra.mxu0 %v1454
          %1520 = vmatprep.mubr.bf16.mxu0 %v1283
          %1521 = vmatmul.mubr.bf16.gmra.mrb[0].mxu0 %v1282
          %v1522 = vpop.f32.mrb[0].mxu0
          %v1523 = vadd.f32 %v1321, %v1522
          %v1524 = vpop.f32.mrb[0].mxu0
          %v1525 = vadd.f32 %v1325, %v1524
          %v1526 = vpop.f32.mrb[0].mxu0
          %v1527 = vadd.f32 %v1321, %v1526
          %v1528 = vpop.f32.mrb[0].mxu0
          %v1529 = vadd.f32 %v1325, %v1528
          %1530 = vdwg.mxu0
          %v1531 = vmax.f32 %v1523, 0.0
          %v1532 = vmax.f32 %v1525, 0.0
          %v1533 = vmax.f32 %v1527, 0.0
          %v1534 = vmax.f32 %v1529, 0.0
          %v1535 = vpack.c.bf16 %v1533, %v1531
          %v1536 = vpack.c.bf16 %v1534, %v1532
          %v1537 = vld [vmem:[#allocation14] sm:$0xf]
          %v1538 = vld [vmem:[#allocation14 + $0x4] sm:$0xf]
          %v1539 = vld [vmem:[#allocation14 + $0x8] sm:$0xf]
          %v1540 = vld [vmem:[#allocation14 + $0xc] sm:$0xf]
          %v1541 = vld [vmem:[#allocation14 + $0x10] sm:$0xf]
          %v1542 = vld [vmem:[#allocation14 + $0x14] sm:$0xf]
          %v1543 = vld [vmem:[#allocation14 + $0x18] sm:$0xf]
          %v1544 = vld [vmem:[#allocation14 + $0x1c] sm:$0xf]
          %v1545 = vld [vmem:[#allocation14 + $0x20] sm:$0xf]
          %v1546 = vld [vmem:[#allocation14 + $0x24] sm:$0xf]
          %v1547 = vld [vmem:[#allocation14 + $0x28] sm:$0xf]
          %v1548 = vld [vmem:[#allocation14 + $0x2c] sm:$0xf]
          %v1549 = vld [vmem:[#allocation14 + $0x30] sm:$0xf]
          %v1550 = vld [vmem:[#allocation14 + $0x34] sm:$0xf]
          %v1551 = vld [vmem:[#allocation14 + $0x38] sm:$0xf]
          %v1552 = vld [vmem:[#allocation14 + $0x3c] sm:$0xf]
          %v1553 = vld [vmem:[#allocation14 + $0x40] sm:$0xf]
          %v1554 = vld [vmem:[#allocation14 + $0x44] sm:$0xf]
          %v1555 = vld [vmem:[#allocation14 + $0x48] sm:$0xf]
          %v1556 = vld [vmem:[#allocation14 + $0x4c] sm:$0xf]
          %v1557 = vld [vmem:[#allocation14 + $0x50] sm:$0xf]
          %v1558 = vld [vmem:[#allocation14 + $0x54] sm:$0xf]
          %v1559 = vld [vmem:[#allocation14 + $0x58] sm:$0xf]
          %v1560 = vld [vmem:[#allocation14 + $0x5c] sm:$0xf]
          %v1561 = vld [vmem:[#allocation14 + $0x60] sm:$0xf]
          %v1562 = vld [vmem:[#allocation14 + $0x64] sm:$0xf]
          %v1563 = vld [vmem:[#allocation14 + $0x68] sm:$0xf]
          %v1564 = vld [vmem:[#allocation14 + $0x6c] sm:$0xf]
          %v1565 = vld [vmem:[#allocation14 + $0x70] sm:$0xf]
          %v1566 = vld [vmem:[#allocation14 + $0x74] sm:$0xf]
          %v1567 = vld [vmem:[#allocation14 + $0x78] sm:$0xf]
          %v1568 = vld [vmem:[#allocation14 + $0x7c] sm:$0xf]
          %v1569 = vld [vmem:[#allocation15] sm:$0x1]
          %v1571 = vlaneseq
          %v1572 = vshrl.u32 %v1571, 7
          %v1573 = vsub.s32 0, %v1572
          %v1574 = vrot.slane %v1569, %v1573
          %v1608 = vunpack.c.l.b16 %v1537
          %v1609 = vunpack.c.l.b16 %v1538
          %v1610 = vunpack.c.l.b16 %v1539
          %v1611 = vunpack.c.l.b16 %v1540
          %v1612 = vunpack.c.l.b16 %v1541
          %v1613 = vunpack.c.l.b16 %v1542
          %v1614 = vunpack.c.l.b16 %v1543
          %v1615 = vunpack.c.l.b16 %v1544
          %v1616 = vunpack.c.l.b16 %v1545
          %v1617 = vunpack.c.l.b16 %v1546
          %v1618 = vunpack.c.l.b16 %v1547
          %v1619 = vunpack.c.l.b16 %v1548
          %v1620 = vunpack.c.l.b16 %v1549
          %v1621 = vunpack.c.l.b16 %v1550
          %v1622 = vunpack.c.l.b16 %v1551
          %v1623 = vunpack.c.l.b16 %v1552
          %v1624 = vunpack.c.l.b16 %v1553
          %v1625 = vunpack.c.l.b16 %v1554
          %v1626 = vunpack.c.l.b16 %v1555
          %v1627 = vunpack.c.l.b16 %v1556
          %v1628 = vunpack.c.l.b16 %v1557
          %v1629 = vunpack.c.l.b16 %v1558
          %v1630 = vunpack.c.l.b16 %v1559
          %v1631 = vunpack.c.l.b16 %v1560
          %v1632 = vunpack.c.l.b16 %v1561
          %v1633 = vunpack.c.l.b16 %v1562
          %v1634 = vunpack.c.l.b16 %v1563
          %v1635 = vunpack.c.l.b16 %v1564
          %v1636 = vunpack.c.l.b16 %v1565
          %v1637 = vunpack.c.l.b16 %v1566
          %v1638 = vunpack.c.l.b16 %v1567
          %v1639 = vunpack.c.l.b16 %v1568
          %v1640 = vpack.c.b16 %v1609, %v1608
          %v1641 = vpack.c.b16 %v1611, %v1610
          %v1642 = vpack.c.b16 %v1613, %v1612
          %v1643 = vpack.c.b16 %v1615, %v1614
          %v1644 = vpack.c.b16 %v1617, %v1616
          %v1645 = vpack.c.b16 %v1619, %v1618
          %v1646 = vpack.c.b16 %v1621, %v1620
          %v1647 = vpack.c.b16 %v1623, %v1622
          %v1648 = vpack.c.b16 %v1625, %v1624
          %v1649 = vpack.c.b16 %v1627, %v1626
          %v1650 = vpack.c.b16 %v1629, %v1628
          %v1651 = vpack.c.b16 %v1631, %v1630
          %v1652 = vpack.c.b16 %v1633, %v1632
          %v1653 = vpack.c.b16 %v1635, %v1634
          %v1654 = vpack.c.b16 %v1637, %v1636
          %v1655 = vpack.c.b16 %v1639, %v1638
          %1672 = vmatprep.subr.bf16.mxu0 0
          %1673 = vmatpush1.bf16.msra.mxu0 %v1640
          %1674 = vmatprep.subr.bf16.mxu0 0
          %1675 = vmatpush1.bf16.msra.mxu0 %v1641
          %1676 = vmatprep.subr.bf16.mxu0 0
          %1677 = vmatpush1.bf16.msra.mxu0 %v1642
          %1678 = vmatprep.subr.bf16.mxu0 0
          %1679 = vmatpush1.bf16.msra.mxu0 %v1643
          %1680 = vmatprep.subr.bf16.mxu0 0
          %1681 = vmatpush1.bf16.msra.mxu0 %v1644
          %1682 = vmatprep.subr.bf16.mxu0 0
          %1683 = vmatpush1.bf16.msra.mxu0 %v1645
          %1684 = vmatprep.subr.bf16.mxu0 0
          %1685 = vmatpush1.bf16.msra.mxu0 %v1646
          %1686 = vmatprep.subr.bf16.mxu0 0
          %1687 = vmatpush1.bf16.msra.mxu0 %v1647
          %1688 = vmatprep.subr.bf16.mxu0 0
          %1689 = vmatpush1.bf16.msra.mxu0 %v1648
          %1690 = vmatprep.subr.bf16.mxu0 0
          %1691 = vmatpush1.bf16.msra.mxu0 %v1649
          %1692 = vmatprep.subr.bf16.mxu0 0
          %1693 = vmatpush1.bf16.msra.mxu0 %v1650
          %1694 = vmatprep.subr.bf16.mxu0 0
          %1695 = vmatpush1.bf16.msra.mxu0 %v1651
          %1696 = vmatprep.subr.bf16.mxu0 0
          %1697 = vmatpush1.bf16.msra.mxu0 %v1652
          %1698 = vmatprep.subr.bf16.mxu0 0
          %1699 = vmatpush1.bf16.msra.mxu0 %v1653
          %1700 = vmatprep.subr.bf16.mxu0 0
          %1701 = vmatpush1.bf16.msra.mxu0 %v1654
          %1702 = vmatprep.subr.bf16.mxu0 0
          %1703 = vmatpush1.bf16.msra.mxu0 %v1655
          %1704 = vmatprep.mubr.bf16.mxu0 %v1536
          %1705 = vmatmul.mubr.bf16.gmra.mrb[0].mxu0 %v1535
          %v1706 = vpop.f32.mrb[0].mxu0
          %v1707 = vadd.f32 %v1574, %v1706
          %v1708 = vpop.f32.mrb[0].mxu0
          %v1709 = vpop.f32.mrb[0].mxu0
          %v1710 = vadd.f32 %v1574, %v1709
          %v1711 = vpop.f32.mrb[0].mxu0
          %1712 = vdwg.mxu0
          %v1713 = vmul.f32 %v1707, %v1707
          %v1714 = vmul.f32 %v1710, %v1710
          %1715 = vadd.xlane.f32.xlu0 %v1713
          %v1716 = vpop.xlane.xlu0 %1715
          %1717 = vadd.xlane.f32.xlu0 %v1714
          %v1718 = vpop.xlane.xlu0 %1717
          %v1719 = vmax.f32 %v1716, 1e-24
          %v1720 = vmax.f32 %v1718, 1e-24
          %v1721 = vrsqrt.pop %v1719
          %v1722 = vrsqrt.pop %v1720
          %v1723 = vmul.f32 %v1707, %v1721
          %v1724 = vmul.f32 %v1710, %v1722
          %v1725 = vpack.c.bf16 %v1724, %v1723
          %v1727 = vunpack.c.l.b16 %v1725
          %v1728 = vunpack.c.h.b16 %v1725
          %v1729 = vpack.c.b16 %v1727, %v1727
          %v1730 = vpack.c.b16 %v1728, %v1728
          %1733 = vst [vmem:[%s709] sm:$0xf] %v1729
          %1734 = vst [vmem:[%s709 + $0x4] sm:$0xf] %v1730
          %v1735 = vld [vmem:[#allocation17] sm:$0xff]
          %v1736 = vld [vmem:[#allocation17 + $0x8] sm:$0xff]
          %v1737 = vld [vmem:[#allocation17 + $0x10] sm:$0xff]
          %v1738 = vld [vmem:[#allocation17 + $0x18] sm:$0xff]
          %v1739 = vld [vmem:[#allocation17 + $0x20] sm:$0xff]
          %v1740 = vld [vmem:[#allocation17 + $0x28] sm:$0xff]
          %v1741 = vld [vmem:[#allocation17 + $0x30] sm:$0xff]
          %v1742 = vld [vmem:[#allocation17 + $0x38] sm:$0xff]
          %v1743 = vld [vmem:[#allocation17 + $0x40] sm:$0xff]
          %v1744 = vld [vmem:[#allocation17 + $0x48] sm:$0xff]
          %v1745 = vld [vmem:[#allocation17 + $0x50] sm:$0xff]
          %v1746 = vld [vmem:[#allocation17 + $0x58] sm:$0xff]
          %v1747 = vld [vmem:[#allocation17 + $0x60] sm:$0xff]
          %v1748 = vld [vmem:[#allocation17 + $0x68] sm:$0xff]
          %v1749 = vld [vmem:[#allocation17 + $0x70] sm:$0xff]
          %v1750 = vld [vmem:[#allocation17 + $0x78] sm:$0xff]
          %v1751 = vld [vmem:[#allocation17 + $0x80] sm:$0xff]
          %v1752 = vld [vmem:[#allocation17 + $0x88] sm:$0xff]
          %v1753 = vld [vmem:[#allocation17 + $0x90] sm:$0xff]
          %v1754 = vld [vmem:[#allocation17 + $0x98] sm:$0xff]
          %v1755 = vld [vmem:[#allocation17 + $0xa0] sm:$0xff]
          %v1756 = vld [vmem:[#allocation17 + $0xa8] sm:$0xff]
          %v1757 = vld [vmem:[#allocation17 + $0xb0] sm:$0xff]
          %v1758 = vld [vmem:[#allocation17 + $0xb8] sm:$0xff]
          %v1759 = vld [vmem:[#allocation17 + $0xc0] sm:$0xff]
          %v1760 = vld [vmem:[#allocation17 + $0xc8] sm:$0xff]
          %v1761 = vld [vmem:[#allocation17 + $0xd0] sm:$0xff]
          %v1762 = vld [vmem:[#allocation17 + $0xd8] sm:$0xff]
          %v1763 = vld [vmem:[#allocation17 + $0xe0] sm:$0xff]
          %v1764 = vld [vmem:[#allocation17 + $0xe8] sm:$0xff]
          %v1765 = vld [vmem:[#allocation17 + $0xf0] sm:$0xff]
          %v1766 = vld [vmem:[#allocation17 + $0xf8] sm:$0xff]
          %v1767 = vld [vmem:[#allocation18] sm:$0x3]
          %v1769 = vlaneseq
          %v1770 = vshrl.u32 %v1769, 7
          %v1771 = vsub.s32 0, %v1770
          %v1772 = vrot.slane %v1767, %v1771
          %v1773 = vlaneseq
          %v1774 = vshrl.u32 %v1773, 7
          %v1775 = vsub.s32 1, %v1774
          %v1776 = vrot.slane %v1767, %v1775
          %v1811 = vunpack.c.l.b16 %v1735
          %v1812 = vunpack.c.h.b16 %v1735
          %v1813 = vunpack.c.l.b16 %v1736
          %v1814 = vunpack.c.h.b16 %v1736
          %v1815 = vunpack.c.l.b16 %v1737
          %v1816 = vunpack.c.h.b16 %v1737
          %v1817 = vunpack.c.l.b16 %v1738
          %v1818 = vunpack.c.h.b16 %v1738
          %v1819 = vunpack.c.l.b16 %v1739
          %v1820 = vunpack.c.h.b16 %v1739
          %v1821 = vunpack.c.l.b16 %v1740
          %v1822 = vunpack.c.h.b16 %v1740
          %v1823 = vunpack.c.l.b16 %v1741
          %v1824 = vunpack.c.h.b16 %v1741
          %v1825 = vunpack.c.l.b16 %v1742
          %v1826 = vunpack.c.h.b16 %v1742
          %v1827 = vunpack.c.l.b16 %v1743
          %v1828 = vunpack.c.h.b16 %v1743
          %v1829 = vunpack.c.l.b16 %v1744
          %v1830 = vunpack.c.h.b16 %v1744
          %v1831 = vunpack.c.l.b16 %v1745
          %v1832 = vunpack.c.h.b16 %v1745
          %v1833 = vunpack.c.l.b16 %v1746
          %v1834 = vunpack.c.h.b16 %v1746
          %v1835 = vunpack.c.l.b16 %v1747
          %v1836 = vunpack.c.h.b16 %v1747
          %v1837 = vunpack.c.l.b16 %v1748
          %v1838 = vunpack.c.h.b16 %v1748
          %v1839 = vunpack.c.l.b16 %v1749
          %v1840 = vunpack.c.h.b16 %v1749
          %v1841 = vunpack.c.l.b16 %v1750
          %v1842 = vunpack.c.h.b16 %v1750
          %v1843 = vunpack.c.l.b16 %v1751
          %v1844 = vunpack.c.h.b16 %v1751
          %v1845 = vunpack.c.l.b16 %v1752
          %v1846 = vunpack.c.h.b16 %v1752
          %v1847 = vunpack.c.l.b16 %v1753
          %v1848 = vunpack.c.h.b16 %v1753
          %v1849 = vunpack.c.l.b16 %v1754
          %v1850 = vunpack.c.h.b16 %v1754
          %v1851 = vunpack.c.l.b16 %v1755
          %v1852 = vunpack.c.h.b16 %v1755
          %v1853 = vunpack.c.l.b16 %v1756
          %v1854 = vunpack.c.h.b16 %v1756
          %v1855 = vunpack.c.l.b16 %v1757
          %v1856 = vunpack.c.h.b16 %v1757
          %v1857 = vunpack.c.l.b16 %v1758
          %v1858 = vunpack.c.h.b16 %v1758
          %v1859 = vunpack.c.l.b16 %v1759
          %v1860 = vunpack.c.h.b16 %v1759
          %v1861 = vunpack.c.l.b16 %v1760
          %v1862 = vunpack.c.h.b16 %v1760
          %v1863 = vunpack.c.l.b16 %v1761
          %v1864 = vunpack.c.h.b16 %v1761
          %v1865 = vunpack.c.l.b16 %v1762
          %v1866 = vunpack.c.h.b16 %v1762
          %v1867 = vunpack.c.l.b16 %v1763
          %v1868 = vunpack.c.h.b16 %v1763
          %v1869 = vunpack.c.l.b16 %v1764
          %v1870 = vunpack.c.h.b16 %v1764
          %v1871 = vunpack.c.l.b16 %v1765
          %v1872 = vunpack.c.h.b16 %v1765
          %v1873 = vunpack.c.l.b16 %v1766
          %v1874 = vunpack.c.h.b16 %v1766
          %v1875 = vpack.c.b16 %v1813, %v1811
          %v1876 = vpack.c.b16 %v1814, %v1812
          %v1877 = vpack.c.b16 %v1817, %v1815
          %v1878 = vpack.c.b16 %v1818, %v1816
          %v1879 = vpack.c.b16 %v1821, %v1819
          %v1880 = vpack.c.b16 %v1822, %v1820
          %v1881 = vpack.c.b16 %v1825, %v1823
          %v1882 = vpack.c.b16 %v1826, %v1824
          %v1883 = vpack.c.b16 %v1829, %v1827
          %v1884 = vpack.c.b16 %v1830, %v1828
          %v1885 = vpack.c.b16 %v1833, %v1831
          %v1886 = vpack.c.b16 %v1834, %v1832
          %v1887 = vpack.c.b16 %v1837, %v1835
          %v1888 = vpack.c.b16 %v1838, %v1836
          %v1889 = vpack.c.b16 %v1841, %v1839
          %v1890 = vpack.c.b16 %v1842, %v1840
          %v1891 = vpack.c.b16 %v1845, %v1843
          %v1892 = vpack.c.b16 %v1846, %v1844
          %v1893 = vpack.c.b16 %v1849, %v1847
          %v1894 = vpack.c.b16 %v1850, %v1848
          %v1895 = vpack.c.b16 %v1853, %v1851
          %v1896 = vpack.c.b16 %v1854, %v1852
          %v1897 = vpack.c.b16 %v1857, %v1855
          %v1898 = vpack.c.b16 %v1858, %v1856
          %v1899 = vpack.c.b16 %v1861, %v1859
          %v1900 = vpack.c.b16 %v1862, %v1860
          %v1901 = vpack.c.b16 %v1865, %v1863
          %v1902 = vpack.c.b16 %v1866, %v1864
          %v1903 = vpack.c.b16 %v1869, %v1867
          %v1904 = vpack.c.b16 %v1870, %v1868
          %v1905 = vpack.c.b16 %v1873, %v1871
          %v1906 = vpack.c.b16 %v1874, %v1872
          %1939 = vmatprep.subr.bf16.mxu0 %v1876
          %1940 = vmatpush1.bf16.msra.mxu0 %v1875
          %1941 = vmatprep.subr.bf16.mxu0 %v1878
          %1942 = vmatpush1.bf16.msra.mxu0 %v1877
          %1943 = vmatprep.subr.bf16.mxu0 %v1880
          %1944 = vmatpush1.bf16.msra.mxu0 %v1879
          %1945 = vmatprep.subr.bf16.mxu0 %v1882
          %1946 = vmatpush1.bf16.msra.mxu0 %v1881
          %1947 = vmatprep.subr.bf16.mxu0 %v1884
          %1948 = vmatpush1.bf16.msra.mxu0 %v1883
          %1949 = vmatprep.subr.bf16.mxu0 %v1886
          %1950 = vmatpush1.bf16.msra.mxu0 %v1885
          %1951 = vmatprep.subr.bf16.mxu0 %v1888
          %1952 = vmatpush1.bf16.msra.mxu0 %v1887
          %1953 = vmatprep.subr.bf16.mxu0 %v1890
          %1954 = vmatpush1.bf16.msra.mxu0 %v1889
          %1955 = vmatprep.subr.bf16.mxu0 %v1892
          %1956 = vmatpush1.bf16.msra.mxu0 %v1891
          %1957 = vmatprep.subr.bf16.mxu0 %v1894
          %1958 = vmatpush1.bf16.msra.mxu0 %v1893
          %1959 = vmatprep.subr.bf16.mxu0 %v1896
          %1960 = vmatpush1.bf16.msra.mxu0 %v1895
          %1961 = vmatprep.subr.bf16.mxu0 %v1898
          %1962 = vmatpush1.bf16.msra.mxu0 %v1897
          %1963 = vmatprep.subr.bf16.mxu0 %v1900
          %1964 = vmatpush1.bf16.msra.mxu0 %v1899
          %1965 = vmatprep.subr.bf16.mxu0 %v1902
          %1966 = vmatpush1.bf16.msra.mxu0 %v1901
          %1967 = vmatprep.subr.bf16.mxu0 %v1904
          %1968 = vmatpush1.bf16.msra.mxu0 %v1903
          %1969 = vmatprep.subr.bf16.mxu0 %v1906
          %1970 = vmatpush1.bf16.msra.mxu0 %v1905
          %1971 = vmatprep.mubr.bf16.mxu0 %v1283
          %1972 = vmatmul.mubr.bf16.gmra.mrb[0].mxu0 %v1282
          %v1973 = vpop.f32.mrb[0].mxu0
          %v1974 = vadd.f32 %v1772, %v1973
          %v1975 = vpop.f32.mrb[0].mxu0
          %v1976 = vadd.f32 %v1776, %v1975
          %v1977 = vpop.f32.mrb[0].mxu0
          %v1978 = vadd.f32 %v1772, %v1977
          %v1979 = vpop.f32.mrb[0].mxu0
          %v1980 = vadd.f32 %v1776, %v1979
          %1981 = vdwg.mxu0
          %v1982 = vmax.f32 %v1974, 0.0
          %v1983 = vmax.f32 %v1976, 0.0
          %v1984 = vmax.f32 %v1978, 0.0
          %v1985 = vmax.f32 %v1980, 0.0
          %v1986 = vpack.c.bf16 %v1984, %v1982
          %v1987 = vpack.c.bf16 %v1985, %v1983
          %v1988 = vld [vmem:[#allocation20] sm:$0xf]
          %v1989 = vld [vmem:[#allocation20 + $0x4] sm:$0xf]
          %v1990 = vld [vmem:[#allocation20 + $0x8] sm:$0xf]
          %v1991 = vld [vmem:[#allocation20 + $0xc] sm:$0xf]
          %v1992 = vld [vmem:[#allocation20 + $0x10] sm:$0xf]
          %v1993 = vld [vmem:[#allocation20 + $0x14] sm:$0xf]
          %v1994 = vld [vmem:[#allocation20 + $0x18] sm:$0xf]
          %v1995 = vld [vmem:[#allocation20 + $0x1c] sm:$0xf]
          %v1996 = vld [vmem:[#allocation20 + $0x20] sm:$0xf]
          %v1997 = vld [vmem:[#allocation20 + $0x24] sm:$0xf]
          %v1998 = vld [vmem:[#allocation20 + $0x28] sm:$0xf]
          %v1999 = vld [vmem:[#allocation20 + $0x2c] sm:$0xf]
          %v2000 = vld [vmem:[#allocation20 + $0x30] sm:$0xf]
          %v2001 = vld [vmem:[#allocation20 + $0x34] sm:$0xf]
          %v2002 = vld [vmem:[#allocation20 + $0x38] sm:$0xf]
          %v2003 = vld [vmem:[#allocation20 + $0x3c] sm:$0xf]
          %v2004 = vld [vmem:[#allocation20 + $0x40] sm:$0xf]
          %v2005 = vld [vmem:[#allocation20 + $0x44] sm:$0xf]
          %v2006 = vld [vmem:[#allocation20 + $0x48] sm:$0xf]
          %v2007 = vld [vmem:[#allocation20 + $0x4c] sm:$0xf]
          %v2008 = vld [vmem:[#allocation20 + $0x50] sm:$0xf]
          %v2009 = vld [vmem:[#allocation20 + $0x54] sm:$0xf]
          %v2010 = vld [vmem:[#allocation20 + $0x58] sm:$0xf]
          %v2011 = vld [vmem:[#allocation20 + $0x5c] sm:$0xf]
          %v2012 = vld [vmem:[#allocation20 + $0x60] sm:$0xf]
          %v2013 = vld [vmem:[#allocation20 + $0x64] sm:$0xf]
          %v2014 = vld [vmem:[#allocation20 + $0x68] sm:$0xf]
          %v2015 = vld [vmem:[#allocation20 + $0x6c] sm:$0xf]
          %v2016 = vld [vmem:[#allocation20 + $0x70] sm:$0xf]
          %v2017 = vld [vmem:[#allocation20 + $0x74] sm:$0xf]
          %v2018 = vld [vmem:[#allocation20 + $0x78] sm:$0xf]
          %v2019 = vld [vmem:[#allocation20 + $0x7c] sm:$0xf]
          %v2020 = vld [vmem:[#allocation21] sm:$0x1]
          %v2022 = vlaneseq
          %v2023 = vshrl.u32 %v2022, 7
          %v2024 = vsub.s32 0, %v2023
          %v2025 = vrot.slane %v2020, %v2024
          %v2059 = vunpack.c.l.b16 %v1988
          %v2060 = vunpack.c.l.b16 %v1989
          %v2061 = vunpack.c.l.b16 %v1990
          %v2062 = vunpack.c.l.b16 %v1991
          %v2063 = vunpack.c.l.b16 %v1992
          %v2064 = vunpack.c.l.b16 %v1993
          %v2065 = vunpack.c.l.b16 %v1994
          %v2066 = vunpack.c.l.b16 %v1995
          %v2067 = vunpack.c.l.b16 %v1996
          %v2068 = vunpack.c.l.b16 %v1997
          %v2069 = vunpack.c.l.b16 %v1998
          %v2070 = vunpack.c.l.b16 %v1999
          %v2071 = vunpack.c.l.b16 %v2000
          %v2072 = vunpack.c.l.b16 %v2001
          %v2073 = vunpack.c.l.b16 %v2002
          %v2074 = vunpack.c.l.b16 %v2003
          %v2075 = vunpack.c.l.b16 %v2004
          %v2076 = vunpack.c.l.b16 %v2005
          %v2077 = vunpack.c.l.b16 %v2006
          %v2078 = vunpack.c.l.b16 %v2007
          %v2079 = vunpack.c.l.b16 %v2008
          %v2080 = vunpack.c.l.b16 %v2009
          %v2081 = vunpack.c.l.b16 %v2010
          %v2082 = vunpack.c.l.b16 %v2011
          %v2083 = vunpack.c.l.b16 %v2012
          %v2084 = vunpack.c.l.b16 %v2013
          %v2085 = vunpack.c.l.b16 %v2014
          %v2086 = vunpack.c.l.b16 %v2015
          %v2087 = vunpack.c.l.b16 %v2016
          %v2088 = vunpack.c.l.b16 %v2017
          %v2089 = vunpack.c.l.b16 %v2018
          %v2090 = vunpack.c.l.b16 %v2019
          %v2091 = vpack.c.b16 %v2060, %v2059
          %v2092 = vpack.c.b16 %v2062, %v2061
          %v2093 = vpack.c.b16 %v2064, %v2063
          %v2094 = vpack.c.b16 %v2066, %v2065
          %v2095 = vpack.c.b16 %v2068, %v2067
          %v2096 = vpack.c.b16 %v2070, %v2069
          %v2097 = vpack.c.b16 %v2072, %v2071
          %v2098 = vpack.c.b16 %v2074, %v2073
          %v2099 = vpack.c.b16 %v2076, %v2075
          %v2100 = vpack.c.b16 %v2078, %v2077
          %v2101 = vpack.c.b16 %v2080, %v2079
          %v2102 = vpack.c.b16 %v2082, %v2081
          %v2103 = vpack.c.b16 %v2084, %v2083
          %v2104 = vpack.c.b16 %v2086, %v2085
          %v2105 = vpack.c.b16 %v2088, %v2087
          %v2106 = vpack.c.b16 %v2090, %v2089
          %2123 = vmatprep.subr.bf16.mxu0 0
          %2124 = vmatpush1.bf16.msra.mxu0 %v2091
          %2125 = vmatprep.subr.bf16.mxu0 0
          %2126 = vmatpush1.bf16.msra.mxu0 %v2092
          %2127 = vmatprep.subr.bf16.mxu0 0
          %2128 = vmatpush1.bf16.msra.mxu0 %v2093
          %2129 = vmatprep.subr.bf16.mxu0 0
          %2130 = vmatpush1.bf16.msra.mxu0 %v2094
          %2131 = vmatprep.subr.bf16.mxu0 0
          %2132 = vmatpush1.bf16.msra.mxu0 %v2095
          %2133 = vmatprep.subr.bf16.mxu0 0
          %2134 = vmatpush1.bf16.msra.mxu0 %v2096
          %2135 = vmatprep.subr.bf16.mxu0 0
          %2136 = vmatpush1.bf16.msra.mxu0 %v2097
          %2137 = vmatprep.subr.bf16.mxu0 0
          %2138 = vmatpush1.bf16.msra.mxu0 %v2098
          %2139 = vmatprep.subr.bf16.mxu0 0
          %2140 = vmatpush1.bf16.msra.mxu0 %v2099
          %2141 = vmatprep.subr.bf16.mxu0 0
          %2142 = vmatpush1.bf16.msra.mxu0 %v2100
          %2143 = vmatprep.subr.bf16.mxu0 0
          %2144 = vmatpush1.bf16.msra.mxu0 %v2101
          %2145 = vmatprep.subr.bf16.mxu0 0
          %2146 = vmatpush1.bf16.msra.mxu0 %v2102
          %2147 = vmatprep.subr.bf16.mxu0 0
          %2148 = vmatpush1.bf16.msra.mxu0 %v2103
          %2149 = vmatprep.subr.bf16.mxu0 0
          %2150 = vmatpush1.bf16.msra.mxu0 %v2104
          %2151 = vmatprep.subr.bf16.mxu0 0
          %2152 = vmatpush1.bf16.msra.mxu0 %v2105
          %2153 = vmatprep.subr.bf16.mxu0 0
          %2154 = vmatpush1.bf16.msra.mxu0 %v2106
          %2155 = vmatprep.mubr.bf16.mxu0 %v1987
          %2156 = vmatmul.mubr.bf16.gmra.mrb[0].mxu0 %v1986
          %v2157 = vpop.f32.mrb[0].mxu0
          %v2158 = vadd.f32 %v2025, %v2157
          %v2159 = vpop.f32.mrb[0].mxu0
          %v2160 = vpop.f32.mrb[0].mxu0
          %v2161 = vadd.f32 %v2025, %v2160
          %v2162 = vpop.f32.mrb[0].mxu0
          %2163 = vdwg.mxu0
          %v2164 = vmul.f32 %v2158, %v2158
          %v2165 = vmul.f32 %v2161, %v2161
          %2166 = vadd.xlane.f32.xlu0 %v2164
          %v2167 = vpop.xlane.xlu0 %2166
          %2168 = vadd.xlane.f32.xlu0 %v2165
          %v2169 = vpop.xlane.xlu0 %2168
          %v2170 = vmax.f32 %v2167, 1e-24
          %v2171 = vmax.f32 %v2169, 1e-24
          %v2172 = vrsqrt.pop %v2170
          %v2173 = vrsqrt.pop %v2171
          %v2174 = vmul.f32 %v2158, %v2172
          %v2175 = vmul.f32 %v2161, %v2173
          %v2176 = vpack.c.bf16 %v2175, %v2174
          %v2178 = vunpack.c.l.b16 %v2176
          %v2179 = vunpack.c.h.b16 %v2176
          %v2180 = vpack.c.b16 %v2178, %v2178
          %v2181 = vpack.c.b16 %v2179, %v2179
          %2184 = vst [vmem:[%s716] sm:$0xf] %v2180
          %2185 = vst [vmem:[%s716 + $0x4] sm:$0xf] %v2181
        $region124: #{tpu_custom_call.1} parent=67 // pred_fallthru
          _
        %s2186 = sand.u32 %s352, 1
        %s2187 = scalar_lea.sflag [#allocation5], %s2186
        %s2188 = sand.u32 %s352, 1
        %s2189 = smul.addr %s2188, 8
        %s2190 = scalar_lea.vmem [#allocation23], %s2189
        %s2191 = sand.u32 %s380, 1
        %s2192 = scalar_lea.sflag [#allocation25], %s2191
        %s2193 = sand.u32 %s380, 1
        %s2194 = smul.addr %s2193, 8
        %s2195 = scalar_lea.vmem [#allocation24], %s2194
        // Predicated region
        $region125: #{tpu_custom_call.1} parent=67 // pred_check
          %p2196 = pneg %p362
        $region126: #{tpu_custom_call.1} parent=67 // pred_check_branch
          %2198 = sbr.rel (%p2196) target = $region128
        $region127: #{tpu_custom_call.1} parent=67 // pred_region
          %s2199 = sadd.s32 %s47, %s48
          %s2200 = smul.u32 2, %s2199
          %s2202 = ssub.s32 128, 128
          %2203 = vsyncadd %s2187, %s2202
          %s2204 = smul.addr %s2200, 64
          %s2205 = scalar_lea.hbm %s12, %s2204
          %s2206 = sshll.u32 %s2190, 4
          %s2207 = int_to_ptr.vmem [resolvable:$true] %s2206
          %2212 = dma.vmem_to_hbm [thread:$0]  %s2207, 128, %s2205, %s2187, 64, 64, 4
        $region128: #{tpu_custom_call.1} parent=67 // pred_fallthru
          _
        // Predicated region
        $region129: #{tpu_custom_call.1} parent=67 // pred_check
          %p2213 = pneg %p390
        $region130: #{tpu_custom_call.1} parent=67 // pred_check_branch
          %2215 = sbr.rel (%p2213) target = $region132
        $region131: #{tpu_custom_call.1} parent=67 // pred_region
          %s2216 = sadd.s32 %s47, %s48
          %s2217 = smul.u32 2, %s2216
          %s2219 = ssub.s32 128, 128
          %2220 = vsyncadd %s2192, %s2219
          %s2221 = smul.addr %s2217, 64
          %s2222 = scalar_lea.hbm %s13, %s2221
          %s2223 = sshll.u32 %s2195, 4
          %s2224 = int_to_ptr.vmem [resolvable:$true] %s2223
          %2229 = dma.vmem_to_hbm [thread:$0]  %s2224, 128, %s2222, %s2192, 64, 64, 4
        $region132: #{tpu_custom_call.1} parent=67 // pred_fallthru
          _
      $region68: #{tpu_custom_call.1} parent=5 // pred_fallthru
        _
      %p2230 = scmp.le.s32.totalorder 2, %s37
      // Predicated region
      $region133: #{tpu_custom_call.1} parent=5 // pred_check
        %p2231 = pneg %p2230
      $region134: #{tpu_custom_call.1} parent=5 // pred_check_branch
        %2233 = sbr.rel (%p2231) target = $region136
      $region135: #{tpu_custom_call.1} parent=5 // pred_region
        %s2234 = ssub.s32 %s37, 2
        // Predicated region
        $region137: #{tpu_custom_call.1} parent=135 // pred_check
          %p2235 = pneg %p368
        $region138: #{tpu_custom_call.1} parent=135 // pred_check_branch
          %2237 = sbr.rel (%p2235) target = $region140
        $region139: #{tpu_custom_call.1} parent=135 // pred_region
          %s2238 = sand.u32 %s353, 1
          %s2239 = scalar_lea.sflag [#allocation5], %s2238
          %s2240 = sand.u32 %s353, 1
          %s2241 = smul.addr %s2240, 8
          %s2242 = scalar_lea.vmem [#allocation23], %s2241
          %2243 = dma.done %s2239, 128
        $region140: #{tpu_custom_call.1} parent=135 // pred_fallthru
          _
        // Predicated region
        $region141: #{tpu_custom_call.1} parent=135 // pred_check
          %p2244 = pneg %p396
        $region142: #{tpu_custom_call.1} parent=135 // pred_check_branch
          %2246 = sbr.rel (%p2244) target = $region144
        $region143: #{tpu_custom_call.1} parent=135 // pred_region
          %s2247 = sand.u32 %s381, 1
          %s2248 = scalar_lea.sflag [#allocation25], %s2247
          %s2249 = sand.u32 %s381, 1
          %s2250 = smul.addr %s2249, 8
          %s2251 = scalar_lea.vmem [#allocation24], %s2250
          %2252 = dma.done %s2248, 128
        $region144: #{tpu_custom_call.1} parent=135 // pred_fallthru
          _
      $region136: #{tpu_custom_call.1} parent=5 // pred_fallthru
        _
    $region6: #{tpu_custom_call.1} parent=1 // loop_footer
      %s41 = sadd.s32 1, %s37
    $region7: #{tpu_custom_call.1} parent=1 // loop_footer_branch
      %36 = sbr.rel target = $region3
    $region8: #{tpu_custom_call.1} parent=1 // loop_exit
      _
    %2253 = vsyncpa [#allocation4], 1
    %s2254 = scalar_lea.sflag [#allocation4], 1
    %2255 = vsyncpa %s2254, 1
    %2256 = vsyncpa [#allocation7], 1
    %s2257 = scalar_lea.sflag [#allocation7], 1
    %2258 = vsyncpa %s2257, 1
    %2259 = vsyncpa [#allocation10], 1
    %2260 = vsyncpa [#allocation13], 1
    %2261 = vsyncpa [#allocation16], 1
    %2262 = vsyncpa [#allocation19], 1
    %2263 = vsyncpa [#allocation22], 1
    %2264 = vsyncpa [#allocation5], 1
    %s2265 = scalar_lea.sflag [#allocation5], 1
    %2266 = vsyncpa %s2265, 1
    %2267 = vsyncpa [#allocation25], 1
    %s2268 = scalar_lea.sflag [#allocation25], 1
    %2269 = vsyncpa %s2268, 1

</llo_original>
